<compile_context>
chip_gen: v7x
topology: tpu7x:2x2x1
jax: 0.10.0
libtpu: 0.0.40
codegen_flags: <defaults>
</compile_context>

<pallas_src>
import functools
import math

import jax
import jax.numpy as jnp
from jax.experimental import pallas as pl
from jax.experimental.pallas import tpu as pltpu

_MIB = 1024 * 1024


def _round_up(x: int, m: int) -> int:
    return ((x + m - 1) // m) * m


def _interp_matrix(out_size: int, in_size: int, mode: str) -> jnp.ndarray:
    """Return M of shape (out_size, in_size) s.t. out = M @ in (PyTorch semantics)."""
    if mode == "nearest":
        # PyTorch legacy 'nearest' (F.interpolate default): src = floor(dst*in/out).
        # (This is intentionally NOT 'nearest-exact'.)
        idx = jnp.floor(
            jnp.arange(out_size, dtype=jnp.float32) * (in_size / out_size)
        ).astype(jnp.int32)
        idx = jnp.clip(idx, 0, in_size - 1)
        return jax.nn.one_hot(idx, in_size, dtype=jnp.float32)
    elif mode == "bilinear":
        # PyTorch 'bilinear', align_corners=False (half-pixel centers)
        scale = in_size / out_size
        src = (jnp.arange(out_size, dtype=jnp.float32) + 0.5) * scale - 0.5
        src = jnp.maximum(src, 0.0)
        i0 = jnp.floor(src).astype(jnp.int32)
        i0 = jnp.clip(i0, 0, in_size - 1)
        lam = src - i0.astype(jnp.float32)
        i1 = jnp.minimum(i0 + 1, in_size - 1)
        m0 = jax.nn.one_hot(i0, in_size, dtype=jnp.float32) * (1.0 - lam)[:, None]
        m1 = jax.nn.one_hot(i1, in_size, dtype=jnp.float32) * lam[:, None]
        return m0 + m1
    else:
        # TODO(synk): other interpolate modes (bicubic/trilinear/area) not implemented.
        raise NotImplementedError(f"mode={mode}")


def _upsample_kernel(x_ref, rw_ref, rh_ref, o_ref, xw_ref, *,
                     block_c, h, ho, aligned):
    # x_ref : (B*H, W)    rw_ref: (W, Wop)    rh_ref: (Ho, H)
    # o_ref : (B*Ho, Wop) xw_ref: (B*H, Wop) VMEM scratch
    prec = jax.lax.Precision.HIGHEST  # bit-fidelity with the f32 PyTorch reference

    # 1) W-interp as ONE wide matmul, streamed straight into a VMEM scratch ref
    #    (no value-slicing / relayout copies later; lane dim is Wop everywhere).
    xw_ref[...] = jnp.dot(x_ref[...], rw_ref[...],
                          preferred_element_type=jnp.float32, precision=prec)
    rh = rh_ref[...]

    if aligned:
        # H is a multiple of 8, so every per-channel row offset is sublane-aligned:
        # use a fori_loop with dynamic (pl.ds) ref slices -> B is not code-size bound.
        def body(c, carry):
            r_in = pl.multiple_of(c * h, 8)
            r_out = pl.multiple_of(c * ho, 8)
            tile = xw_ref[pl.ds(r_in, h), :]                    # (H, Wop) ref slice
            o_ref[pl.ds(r_out, ho), :] = jnp.dot(
                rh, tile, preferred_element_type=jnp.float32,
                precision=prec).astype(o_ref.dtype)
            return carry

        jax.lax.fori_loop(0, block_c, body, 0, unroll=min(block_c, 8))
    else:
        # Fallback for H % 8 != 0: static slices (offsets known at compile time);
        # block_c is capped (<=32) in this case to bound code size.
        for c in range(block_c):
            tile = xw_ref[c * h:(c + 1) * h, :]
            o_ref[c * ho:(c + 1) * ho, :] = jnp.dot(
                rh, tile, preferred_element_type=jnp.float32,
                precision=prec).astype(o_ref.dtype)


def _vmem_budget_and_capacity():
    """(budget_bytes_for_blocks, vmem_capacity_bytes), generation-aware."""
    cap = 64 * _MIB  # conservative default (v7x physical VMEM)
    is_v5 = False
    try:
        is_v5 = "v5" in jax.devices()[0].device_kind.lower()
    except Exception:  # pragma: no cover
        pass
    try:
        info = pltpu.get_tpu_info()
        for attr in ("vmem_capacity_bytes", "vmem_size_bytes", "vmem_bytes"):
            v = getattr(info, attr, None)
            if v:
                cap = int(v)
                break
    except Exception:  # pragma: no cover
        pass
    budget = min(int(cap * 0.45), 48 * _MIB)   # ~29 MiB on v7x, 48 MiB on v6e
    if is_v5:
        # v5e: single vector-store slot; prefer smaller blocks over spilling.
        budget = min(budget, 14 * _MIB)
    return budget, cap


def _padded_tile_bytes(h, w, ho, wop):
    """Lane/sublane padded f32 per-channel-slice and weight footprints."""
    wp = _round_up(w, 128)
    wop_p = _round_up(wop, 128)
    hp = _round_up(h, 128)
    # in + out tiles double-buffered by the pipeline; xw scratch single-buffered.
    per_slice = 4 * (2 * h * wp + h * wop_p + 2 * ho * wop_p)
    weights = 4 * 2 * (_round_up(w, 8) * wop_p + _round_up(ho, 8) * hp)
    return per_slice, weights


def _vmem_footprint(b, h, w, ho, wop):
    per_slice, weights = _padded_tile_bytes(h, w, ho, wop)
    return b * per_slice + weights


def _pick_block_channels(nc, h, w, ho, wop, budget, aligned):
    """How many N*C slices per grid step, and the padded NC."""
    per_slice, weights = _padded_tile_bytes(h, w, ho, wop)
    avail = max(per_slice, budget - weights)
    b = max(1, avail // per_slice)
    if not aligned:
        b = min(b, 32)  # static-unroll fallback: bound code size

    step = 8 // math.gcd(h, 8)  # keep B*H (and hence B*Ho) a multiple of 8 sublanes
    # Never collapse to one grid step: >=2 (prefer >=4) steps keep the DMA
    # pipeline overlapping and let both v7x TensorCores work the "parallel" axis.
    if nc >= 4 * step:
        b_cap = max(step, ((nc // 4) // step) * step)
    elif nc > step:
        b_cap = max(step, ((nc // 2) // step) * step)
    else:
        b_cap = nc
    b = min(b, b_cap)

    b = max(step, (b // step) * step)
    if b >= nc:
        return nc, nc  # single full-array block: always legal
    nc_pad = _round_up(nc, b)
    return b, nc_pad


def _maybe_pad_out_width(wo):
    """Pad output lane dim to a multiple of 128 only when the extra HBM
    writeback is small (<= ~12.5%); lane-dense stores otherwise cost more
    memory bandwidth than they save for narrow maps."""
    wop = _round_up(wo, 128)
    return wop if (wop - wo) * 8 <= wo else wo


@functools.partial(jax.jit, static_argnames=("scale_factor", "mode", "block_channels"))
def upsample(x: jnp.ndarray, scale_factor, mode: str = "nearest",
             block_channels=None) -> jnp.ndarray:
    """Equivalent of SalEMA.Upsample(scale_factor, mode)(x), x is NCHW float32."""
    N, C, H, W = x.shape
    s = int(scale_factor)  # TODO(synk): non-integer / per-axis scale factors
    Ho, Wo = H * s, W * s
    NC = N * C
    Wop = _maybe_pad_out_width(Wo)
    aligned = (H % 8 == 0)

    rh = _interp_matrix(Ho, H, mode)                 # (Ho, H)
    rw = _interp_matrix(Wo, W, mode).T               # (W, Wo)
    if Wop != Wo:
        rw = jnp.pad(rw, ((0, 0), (0, Wop - Wo)))    # zero cols -> zero pad lanes

    budget, cap = _vmem_budget_and_capacity()
    if block_channels is None:
        B, NC_pad = _pick_block_channels(NC, H, W, Ho, Wop, budget, aligned)
    else:
        step = 8 // math.gcd(H, 8)
        B = max(step, _round_up(int(block_channels), step))   # snap to alignment
        if not aligned:
            B = min(B, 32)
        B = min(B, _round_up(NC, step))
        NC_pad = _round_up(NC, B)

    footprint = _vmem_footprint(B, H, W, Ho, Wop)
    vmem_limit = int(min(cap - 4 * _MIB, max(32 * _MIB, footprint + 16 * _MIB)))

    x_flat = x.reshape(NC, H, W).astype(jnp.float32)
    if NC_pad != NC:
        x_flat = jnp.pad(x_flat, ((0, NC_pad - NC), (0, 0), (0, 0)))
    x2d = x_flat.reshape(NC_pad * H, W)              # free layout plumbing (row-major)

    kernel = functools.partial(_upsample_kernel, block_c=B, h=H, ho=Ho,
                               aligned=aligned)

    cost = pl.CostEstimate(
        flops=2 * NC_pad * Wop * (H * W + Ho * H),
        transcendentals=0,
        bytes_accessed=4 * (NC_pad * H * W + NC_pad * Ho * Wop + W * Wop + Ho * H),
    )

    out2d = pl.pallas_call(
        kernel,
        out_shape=jax.ShapeDtypeStruct((NC_pad * Ho, Wop), jnp.float32),
        grid_spec=pltpu.PrefetchScalarGridSpec(
            num_scalar_prefetch=0,
            grid=(NC_pad // B,),
            in_specs=[
                pl.BlockSpec((B * H, W), lambda i: (i, 0)),
                pl.BlockSpec((W, Wop), lambda i: (0, 0)),
                pl.BlockSpec((Ho, H), lambda i: (0, 0)),
            ],
            out_specs=pl.BlockSpec((B * Ho, Wop), lambda i: (i, 0)),
            scratch_shapes=[pltpu.VMEM((B * H, Wop), jnp.float32)],
        ),
        compiler_params=pltpu.CompilerParams(
            dimension_semantics=("parallel",),
            vmem_limit_bytes=vmem_limit,
        ),
        cost_estimate=cost,
    )(x2d, rw, rh)

    out = out2d.reshape(NC_pad, Ho, Wop)[:NC, :, :Wo].reshape(N, C, Ho, Wo)
    return out


if __name__ == "__main__":
    key = jax.random.PRNGKey(0)
    x = jax.random.normal(key, (2, 4, 16, 16), dtype=jnp.float32)
    scale = 2

    # mode='nearest' (as used in SalEMA's decoder Upsample layers)
    out_nearest = upsample(x, scale_factor=scale, mode="nearest")
    jax.block_until_ready(out_nearest)
    ref_nearest = jnp.repeat(jnp.repeat(x, scale, axis=2), scale, axis=3)
    assert out_nearest.shape == (2, 4, 32, 32)
    assert jnp.allclose(out_nearest, ref_nearest, atol=1e-5, rtol=1e-5)

    # mode='bilinear' through the same kernel; compare against a dense-matrix reference
    out_bilinear = upsample(x, scale_factor=scale, mode="bilinear")
    jax.block_until_ready(out_bilinear)
    rh_ref = _interp_matrix(32, 16, "bilinear")
    rw_ref = _interp_matrix(32, 16, "bilinear")
    ref_bilinear = jnp.einsum("oh,nchw,pw->ncop", rh_ref, x, rw_ref,
                              precision=jax.lax.Precision.HIGHEST)
    assert out_bilinear.shape == (2, 4, 32, 32)
    assert jnp.allclose(out_bilinear, ref_bilinear, atol=1e-4, rtol=1e-4)

    # exercise the multi-block grid + channel-padding path (NC=6, B=4 -> NC_pad=8, 2 steps)
    x2 = jax.random.normal(jax.random.PRNGKey(1), (1, 6, 16, 16), dtype=jnp.float32)
    out2 = upsample(x2, scale_factor=scale, mode="nearest", block_channels=4)
    jax.block_until_ready(out2)
    ref2 = jnp.repeat(jnp.repeat(x2, scale, axis=2), scale, axis=3)
    assert out2.shape == (1, 6, 32, 32)
    assert jnp.allclose(out2, ref2, atol=1e-5, rtol=1e-5)

    print("KERNEL_OK")
</pallas_src>

<mosaic_0001>
module attributes {stable_mosaic.version = 11 : i64} {
  func.func @_upsample_kernel(%arg0: i32, %arg1: memref<32x16xf32, #tpu.memory_space<vmem>>, %arg2: memref<16x32xf32, #tpu.memory_space<vmem>>, %arg3: memref<32x16xf32, #tpu.memory_space<vmem>>, %arg4: memref<64x32xf32, #tpu.memory_space<vmem>>, %arg5: memref<32x32xf32, #tpu.memory_space<vmem>>) attributes {dimension_semantics = [#tpu.dimension_semantics<parallel>], iteration_bounds = array<i64: 4>, scalar_prefetch = 0 : i64, scratch_operands = 1 : i64, tpu.core_type = #tpu.core_type<tc>, window_params = [{transform_indices = @transform_0, window_bounds = array<i64: 32, 16>}, {pipeline_mode = #tpu.pipeline_mode<synchronous>, transform_indices = @transform_1, window_bounds = array<i64: 16, 32>}, {pipeline_mode = #tpu.pipeline_mode<synchronous>, transform_indices = @transform_2, window_bounds = array<i64: 32, 16>}, {transform_indices = @transform_3, window_bounds = array<i64: 64, 32>}]} {
    %c0 = arith.constant 0 : index
    %c0_0 = arith.constant 0 : index
    %0 = vector.load %arg1[%c0, %c0_0] : memref<32x16xf32, #tpu.memory_space<vmem>>, vector<32x16xf32>
    %c0_1 = arith.constant 0 : index
    %c0_2 = arith.constant 0 : index
    %1 = vector.load %arg2[%c0_1, %c0_2] : memref<16x32xf32, #tpu.memory_space<vmem>>, vector<16x32xf32>
    %cst = arith.constant dense<0.000000e+00> : vector<32x32xf32>
    %2 = tpu.matmul %0, %1, %cst {dimension_numbers = #tpu.dot_dimension_numbers<[1], [0], [0], [1], [0, 0, 1, 1], [], []>, precision = #tpu.contract_precision<fp32>} : vector<32x16xf32>, vector<16x32xf32>, vector<32x32xf32> -> vector<32x32xf32>
    %c0_3 = arith.constant 0 : index
    %c0_4 = arith.constant 0 : index
    %3 = vector.load %arg5[%c0_3, %c0_4] : memref<32x32xf32, #tpu.memory_space<vmem>>, vector<32x32xf32>
    tpu.vector_store %arg5[%c0_3, %c0_4], %2 {strides = array<i32>} : memref<32x32xf32, #tpu.memory_space<vmem>>, vector<32x32xf32>,
    %c0_5 = arith.constant 0 : index
    %c0_6 = arith.constant 0 : index
    %4 = vector.load %arg3[%c0_5, %c0_6] : memref<32x16xf32, #tpu.memory_space<vmem>>, vector<32x16xf32>
    %c0_i32 = arith.constant 0 : i32
    %c16_i32 = arith.constant 16 : i32
    %5 = arith.muli %c0_i32, %c16_i32 : i32
    %6 = tpu.assume_multiple %5, 8 : i32
    %c32_i32 = arith.constant 32 : i32
    %7 = arith.muli %c0_i32, %c32_i32 : i32
    %8 = tpu.assume_multiple %7, 8 : i32
    %9 = arith.index_cast %6 : i32 to index
    %c0_7 = arith.constant 0 : index
    %10 = vector.load %arg5[%9, %c0_7] : memref<32x32xf32, #tpu.memory_space<vmem>>, vector<16x32xf32>
    %cst_8 = arith.constant dense<0.000000e+00> : vector<32x32xf32>
    %11 = tpu.matmul %4, %10, %cst_8 {dimension_numbers = #tpu.dot_dimension_numbers<[1], [0], [0], [1], [0, 0, 1, 1], [], []>, precision = #tpu.contract_precision<fp32>} : vector<32x16xf32>, vector<16x32xf32>, vector<32x32xf32> -> vector<32x32xf32>
    %12 = arith.index_cast %8 : i32 to index
    %c0_9 = arith.constant 0 : index
    %13 = vector.load %arg4[%12, %c0_9] : memref<64x32xf32, #tpu.memory_space<vmem>>, vector<32x32xf32>
    tpu.vector_store %arg4[%12, %c0_9], %11 {strides = array<i32>} : memref<64x32xf32, #tpu.memory_space<vmem>>, vector<32x32xf32>,
    %c1_i32 = arith.constant 1 : i32
    %c16_i32_10 = arith.constant 16 : i32
    %14 = arith.muli %c1_i32, %c16_i32_10 : i32
    %15 = tpu.assume_multiple %14, 8 : i32
    %c32_i32_11 = arith.constant 32 : i32
    %16 = arith.muli %c1_i32, %c32_i32_11 : i32
    %17 = tpu.assume_multiple %16, 8 : i32
    %18 = arith.index_cast %15 : i32 to index
    %c0_12 = arith.constant 0 : index
    %19 = vector.load %arg5[%18, %c0_12] : memref<32x32xf32, #tpu.memory_space<vmem>>, vector<16x32xf32>
    %cst_13 = arith.constant dense<0.000000e+00> : vector<32x32xf32>
    %20 = tpu.matmul %4, %19, %cst_13 {dimension_numbers = #tpu.dot_dimension_numbers<[1], [0], [0], [1], [0, 0, 1, 1], [], []>, precision = #tpu.contract_precision<fp32>} : vector<32x16xf32>, vector<16x32xf32>, vector<32x32xf32> -> vector<32x32xf32>
    %21 = arith.index_cast %17 : i32 to index
    %c0_14 = arith.constant 0 : index
    %22 = vector.load %arg4[%21, %c0_14] : memref<64x32xf32, #tpu.memory_space<vmem>>, vector<32x32xf32>
    tpu.vector_store %arg4[%21, %c0_14], %20 {strides = array<i32>} : memref<64x32xf32, #tpu.memory_space<vmem>>, vector<32x32xf32>,
    %c2_i32 = arith.constant 2 : i32
    return
  }
  func.func @transform_0(%arg0: i32) -> (i32, i32) {
    %c0_i32 = arith.constant 0 : i32
    %c0_i32_0 = arith.constant 0 : i32
    return %arg0, %c0_i32 : i32, i32
  }
  func.func @transform_1(%arg0: i32) -> (i32, i32) {
    %c0_i32 = arith.constant 0 : i32
    %c0_i32_0 = arith.constant 0 : i32
    %c0_i32_1 = arith.constant 0 : i32
    return %c0_i32, %c0_i32_0 : i32, i32
  }
  func.func @transform_2(%arg0: i32) -> (i32, i32) {
    %c0_i32 = arith.constant 0 : i32
    %c0_i32_0 = arith.constant 0 : i32
    %c0_i32_1 = arith.constant 0 : i32
    return %c0_i32, %c0_i32_0 : i32, i32
  }
  func.func @transform_3(%arg0: i32) -> (i32, i32) {
    %c0_i32 = arith.constant 0 : i32
    %c0_i32_0 = arith.constant 0 : i32
    return %arg0, %c0_i32 : i32, i32
  }
}

</mosaic_0001>

<llo_original>
// kernel: upsample.1
$region0: #{upsample.1}
  #allocation0 [shape = 'u32[]', space=smem, size = 0x4, offset = 0x4, fixed_abs, tag = 'smem constant byte address 0x4 - core index']
  #allocation1 [shape = 'u32[144,128]{1,0:T(1,128)}', space=vmem, size = 0x12000, scoped, tag = 'internal scratch']
  #allocation2 [shape = 'f32[32,32]{1,0:T(8,128)}', space=vmem, size = 0x4000, scoped, tag = 'scratch operand']
  %s0 = inlined_call_operand.hbm [shape: f32[128,16], index: 0, kind: input, shape index: {}]
  %s1 = inlined_call_operand.vmem [shape: f32[16,32], index: 1, kind: input, shape index: {}]
  %s2 = inlined_call_operand.vmem [shape: f32[32,16], index: 2, kind: input, shape index: {}]
  %s3 = inlined_call_operand.hbm [shape: f32[256,32], index: 3, kind: output, shape index: {}]
  %s4 = sld [smem:[#allocation0]]
  $region49: #{upsample.1} parent=0
    _
  %s6 = ssub.s32 1, %s4
  %s7 = scalar_select 0, %s6, %s4
  $region1: #{upsample.1} parent=0
    #allocation3 [shape = 'u8[32768]{0}', space=vmem, size = 0x8000, scoped, tag = 'input window, operand 0']
    #allocation4 [shape = 's32[2]{0}', space=sflag, size = 0x8, scoped, tag = 'scoped memory for upsample.1']
    #allocation5 [shape = 's32[2]{0}', space=sflag, size = 0x8, scoped, tag = 'scoped memory for upsample.1']
    #allocation6 [shape = 'u8[65536]{0}', space=vmem, size = 0x10000, scoped, tag = 'output window, operand 0']
    %8 = vsyncpa [#allocation4], 0
    %s9 = scalar_lea.sflag [#allocation4], 1
    %10 = vsyncpa %s9, 0
    %11 = vsyncpa [#allocation5], 0
    %s12 = scalar_lea.sflag [#allocation5], 1
    %13 = vsyncpa %s12, 0
    loop: start=0, step=1, limit=6
    $region2: #{upsample.1} parent=1 // loop_pre_header
      _
    $region3: #{upsample.1} parent=1 // loop_header
      %s15 = sphi 0, %s19
      %p16 = scmp.ge.s32.totalorder %s15, 6
      %s25 = sphi 0, %s27
      %s28 = sphi 0, %s25
      %s29 = sphi 0, %s28
      %s45 = sphi 0, %s29
      %s49 = sphi 0, %s49
      %s51 = sphi 0, %s49
      %s52 = sphi 0, %s51
      %s66 = sphi 0, %s52
      %s70 = sphi 0, %s70
      %s72 = sphi 0, %s70
      %s73 = sphi 0, %s72
      %s87 = sphi 0, %s73
      %s93 = sphi 0, %s95
      %s96 = sphi 0, %s93
      %s97 = sphi 0, %s96
      %s113 = sphi 0, %s97
    $region4: #{upsample.1} parent=1 // loop_header_branch
      %18 = sbr.rel (%p16) target = $region8
    $region5: #{upsample.1} parent=1 // loop_body
      %s20 = ssub.s32 %s15, 1
      %s21 = ssub.s32 %s15, 2
      %s22 = sadd.s32 %s15, 1
      %s23 = ssub.s32 %s15, %s22
      %p24 = scmp.eq.s32.totalorder %s23, 0
      %s26 = sadd.s32 %s25, 1
      %s27 = scalar_select %p24, %s25, %s26
      %p30 = pneg %p24
      %p31 = scmp.eq.s32.totalorder %s15, 3
      %p32 = por %p30, %p31
      %p33 = scmp.ne.s32.totalorder %s25, %s28
      %p34 = scmp.eq.s32.totalorder %s15, 0
      %p35 = por %p33, %p34
      %p36 = scmp.ne.s32.totalorder %s25, %s28
      %p37 = scmp.eq.s32.totalorder %s20, 3
      %p38 = por %p36, %p37
      %p39 = scmp.ne.s32.totalorder %s28, %s29
      %p40 = scmp.eq.s32.totalorder %s20, 0
      %p41 = por %p39, %p40
      %p42 = scmp.ne.s32.totalorder %s28, %s29
      %p43 = scmp.eq.s32.totalorder %s21, 3
      %p44 = por %p42, %p43
      %p46 = scmp.ne.s32.totalorder %s29, %s45
      %p47 = scmp.eq.s32.totalorder %s21, 0
      %p48 = por %p46, %p47
      %s50 = sadd.s32 %s49, 1
      %p53 = scmp.eq.s32.totalorder %s15, 3
      %p54 = scmp.ne.s32.totalorder %s49, %s51
      %p55 = scmp.eq.s32.totalorder %s15, 0
      %p56 = por %p54, %p55
      %p57 = scmp.ne.s32.totalorder %s49, %s51
      %p58 = scmp.eq.s32.totalorder %s20, 3
      %p59 = por %p57, %p58
      %p60 = scmp.ne.s32.totalorder %s51, %s52
      %p61 = scmp.eq.s32.totalorder %s20, 0
      %p62 = por %p60, %p61
      %p63 = scmp.ne.s32.totalorder %s51, %s52
      %p64 = scmp.eq.s32.totalorder %s21, 3
      %p65 = por %p63, %p64
      %p67 = scmp.ne.s32.totalorder %s52, %s66
      %p68 = scmp.eq.s32.totalorder %s21, 0
      %p69 = por %p67, %p68
      %s71 = sadd.s32 %s70, 1
      %p74 = scmp.eq.s32.totalorder %s15, 3
      %p75 = scmp.ne.s32.totalorder %s70, %s72
      %p76 = scmp.eq.s32.totalorder %s15, 0
      %p77 = por %p75, %p76
      %p78 = scmp.ne.s32.totalorder %s70, %s72
      %p79 = scmp.eq.s32.totalorder %s20, 3
      %p80 = por %p78, %p79
      %p81 = scmp.ne.s32.totalorder %s72, %s73
      %p82 = scmp.eq.s32.totalorder %s20, 0
      %p83 = por %p81, %p82
      %p84 = scmp.ne.s32.totalorder %s72, %s73
      %p85 = scmp.eq.s32.totalorder %s21, 3
      %p86 = por %p84, %p85
      %p88 = scmp.ne.s32.totalorder %s73, %s87
      %p89 = scmp.eq.s32.totalorder %s21, 0
      %p90 = por %p88, %p89
      %s91 = ssub.s32 %s15, %s22
      %p92 = scmp.eq.s32.totalorder %s91, 0
      %s94 = sadd.s32 %s93, 1
      %s95 = scalar_select %p92, %s93, %s94
      %p98 = pneg %p92
      %p99 = scmp.eq.s32.totalorder %s15, 3
      %p100 = por %p98, %p99
      %p101 = scmp.ne.s32.totalorder %s93, %s96
      %p102 = scmp.eq.s32.totalorder %s15, 0
      %p103 = por %p101, %p102
      %p104 = scmp.ne.s32.totalorder %s93, %s96
      %p105 = scmp.eq.s32.totalorder %s20, 3
      %p106 = por %p104, %p105
      %p107 = scmp.ne.s32.totalorder %s96, %s97
      %p108 = scmp.eq.s32.totalorder %s20, 0
      %p109 = por %p107, %p108
      %p110 = scmp.ne.s32.totalorder %s96, %s97
      %p111 = scmp.eq.s32.totalorder %s21, 3
      %p112 = por %p110, %p111
      %p114 = scmp.ne.s32.totalorder %s97, %s113
      %p115 = scmp.eq.s32.totalorder %s21, 0
      %p116 = por %p114, %p115
      %p117 = scmp.le.s32.totalorder 1, %s15
      %p118 = scmp.lt.s32.totalorder %s15, 5
      %p119 = pnand %p117, %p118
      %p120 = pneg %p119
      // Predicated region
      $region9: #{upsample.1} parent=5 // pred_check
        _
      $region10: #{upsample.1} parent=5 // pred_check_branch
        %122 = sbr.rel (%p119) target = $region12
      $region11: #{upsample.1} parent=5 // pred_region
        %s123 = ssub.s32 %s15, 1
        // Predicated region
        $region13: #{upsample.1} parent=11 // pred_check
          %p124 = pneg %p62
        $region14: #{upsample.1} parent=11 // pred_check_branch
          %126 = sbr.rel (%p124) target = $region16
        $region15: #{upsample.1} parent=11 // pred_region
          _
        $region16: #{upsample.1} parent=11 // pred_fallthru
          _
        // Predicated region
        $region17: #{upsample.1} parent=11 // pred_check
          %p127 = pneg %p83
        $region18: #{upsample.1} parent=11 // pred_check_branch
          %129 = sbr.rel (%p127) target = $region20
        $region19: #{upsample.1} parent=11 // pred_region
          _
        $region20: #{upsample.1} parent=11 // pred_fallthru
          _
      $region12: #{upsample.1} parent=5 // pred_fallthru
        _
      %p130 = scmp.lt.s32.totalorder %s15, 4
      // Predicated region
      $region21: #{upsample.1} parent=5 // pred_check
        %p131 = pneg %p130
      $region22: #{upsample.1} parent=5 // pred_check_branch
        %133 = sbr.rel (%p131) target = $region24
      $region23: #{upsample.1} parent=5 // pred_region
        // Predicated region
        $region25: #{upsample.1} parent=23 // pred_check
          %p134 = pneg %p35
        $region26: #{upsample.1} parent=23 // pred_check_branch
          %136 = sbr.rel (%p134) target = $region28
        $region27: #{upsample.1} parent=23 // pred_region
          %s137 = sand.u32 %s25, 1
          %s138 = scalar_lea.sflag [#allocation4], %s137
          %s139 = sand.u32 %s25, 1
          %s140 = smul.addr %s139, 32
          %s141 = scalar_lea.vmem [#allocation3], %s140
          %s142 = smul.u32 4, %s15
          %s144 = ssub.s32 512, 512
          %145 = vsyncadd %s138, %s144
          %s146 = smul.addr %s142, 128
          %s147 = scalar_lea.hbm %s0, %s146
          %s148 = sshll.u32 %s141, 4
          %s149 = int_to_ptr.vmem [resolvable:$true] %s148
          %154 = dma.hbm_to_vmem [thread:$0]  %s147, 512, %s149, %s138, 128, 128, 8
        $region28: #{upsample.1} parent=23 // pred_fallthru
          _
      $region24: #{upsample.1} parent=5 // pred_fallthru
        _
      %p155 = scmp.le.s32.totalorder 1, %s15
      %p156 = scmp.lt.s32.totalorder %s15, 5
      %p157 = pnand %p155, %p156
      %p158 = pneg %p157
      // Predicated region
      $region29: #{upsample.1} parent=5 // pred_check
        _
      $region30: #{upsample.1} parent=5 // pred_check_branch
        %160 = sbr.rel (%p157) target = $region32
      $region31: #{upsample.1} parent=5 // pred_region
        %s161 = ssub.s32 %s15, 1
        %s162 = sand.u32 %s28, 1
        %s163 = scalar_lea.sflag [#allocation4], %s162
        %s164 = sand.u32 %s28, 1
        %s165 = smul.addr %s164, 32
        %s166 = scalar_lea.vmem [#allocation3], %s165
        // Predicated region
        $region33: #{upsample.1} parent=31 // pred_check
          %p167 = pneg %p41
        $region34: #{upsample.1} parent=31 // pred_check_branch
          %169 = sbr.rel (%p167) target = $region36
        $region35: #{upsample.1} parent=31 // pred_region
          %170 = dma.done %s163, 512
        $region36: #{upsample.1} parent=31 // pred_fallthru
          _
        %s171 = sand.u32 %s28, 1
        %s172 = scalar_lea.sflag [#allocation4], %s171
        %s173 = sand.u32 %s28, 1
        %s174 = smul.addr %s173, 32
        %s175 = scalar_lea.vmem [#allocation3], %s174
        %p176 = pneg %p41
        %p177 = pneg %p38
        %p178 = pneg %p62
        %p179 = pneg %p59
        %p180 = pneg %p83
        %p181 = pneg %p80
        %p182 = pneg %p109
        %p183 = pneg %p106
        %s184 = sand.u32 %s96, 1
        %s185 = scalar_lea.sflag [#allocation5], %s184
        %s186 = sand.u32 %s96, 1
        %s187 = smul.addr %s186, 64
        %s188 = scalar_lea.vmem [#allocation6], %s187
        %s189 = smul.u32 4, %s20
        %s190 = smul.u32 8, %s20
        %v191 = vld [vmem:[%s166] sm:$0xff]
        %v192 = vld [vmem:[%s166 + $0x8] sm:$0xff]
        %v193 = vld [vmem:[%s166 + $0x10] sm:$0xff]
        %v194 = vld [vmem:[%s166 + $0x18] sm:$0xff]
        %v195 = vld [vmem:[%s1] sm:$0xff]
        %v196 = vld [vmem:[%s1 + $0x8] sm:$0xff]
        %vm197 = vcmask 130048
        %v199 = vsel %vm197, %v191, 0
        %v202 = vsel %vm197, %v192, 0
        %v205 = vsel %vm197, %v193, 0
        %v208 = vsel %vm197, %v194, 0
        %210 = vmatprep.subr.mxu0 0.0
        %v211 = vand.u32 %v195, 4294901760
        %212 = vmatpush1.msra.mxu0 %v211
        %213 = vmatprep.subr.mxu0 0.0
        %v214 = vand.u32 %v196, 4294901760
        %215 = vmatpush1.msra.mxu0 %v214
        %216 = vmatprep.subr.mxu0 0.0
        %217 = vmatpush1.msra.mxu0 0.0
        %218 = vmatprep.subr.mxu0 0.0
        %219 = vmatpush1.msra.mxu0 0.0
        %220 = vmatprep.subr.mxu0 0.0
        %221 = vmatpush1.msra.mxu0 0.0
        %222 = vmatprep.subr.mxu0 0.0
        %223 = vmatpush1.msra.mxu0 0.0
        %224 = vmatprep.subr.mxu0 0.0
        %225 = vmatpush1.msra.mxu0 0.0
        %226 = vmatprep.subr.mxu0 0.0
        %227 = vmatpush1.msra.mxu0 0.0
        %228 = vmatprep.subr.mxu0 0.0
        %229 = vmatpush1.msra.mxu0 0.0
        %230 = vmatprep.subr.mxu0 0.0
        %231 = vmatpush1.msra.mxu0 0.0
        %232 = vmatprep.subr.mxu0 0.0
        %233 = vmatpush1.msra.mxu0 0.0
        %234 = vmatprep.subr.mxu0 0.0
        %235 = vmatpush1.msra.mxu0 0.0
        %236 = vmatprep.subr.mxu0 0.0
        %237 = vmatpush1.msra.mxu0 0.0
        %238 = vmatprep.subr.mxu0 0.0
        %239 = vmatpush1.msra.mxu0 0.0
        %240 = vmatprep.subr.mxu0 0.0
        %241 = vmatpush1.msra.mxu0 0.0
        %242 = vmatprep.subr.mxu0 0.0
        %243 = vmatpush1.msra.mxu0 0.0
        %244 = vmatprep.subr.mxu0 0.0
        %245 = vmatpush1.msra.mxu0 0.0
        %246 = vmatprep.subr.mxu0 0.0
        %247 = vmatpush1.msra.mxu0 0.0
        %248 = vmatprep.subr.mxu0 0.0
        %249 = vmatpush1.msra.mxu0 0.0
        %250 = vmatprep.subr.mxu0 0.0
        %251 = vmatpush1.msra.mxu0 0.0
        %252 = vmatprep.subr.mxu0 0.0
        %253 = vmatpush1.msra.mxu0 0.0
        %254 = vmatprep.subr.mxu0 0.0
        %255 = vmatpush1.msra.mxu0 0.0
        %256 = vmatprep.subr.mxu0 0.0
        %257 = vmatpush1.msra.mxu0 0.0
        %258 = vmatprep.subr.mxu0 0.0
        %259 = vmatpush1.msra.mxu0 0.0
        %260 = vmatprep.subr.mxu0 0.0
        %261 = vmatpush1.msra.mxu0 0.0
        %262 = vmatprep.subr.mxu0 0.0
        %263 = vmatpush1.msra.mxu0 0.0
        %264 = vmatprep.subr.mxu0 0.0
        %265 = vmatpush1.msra.mxu0 0.0
        %266 = vmatprep.subr.mxu0 0.0
        %267 = vmatpush1.msra.mxu0 0.0
        %268 = vmatprep.subr.mxu0 0.0
        %269 = vmatpush1.msra.mxu0 0.0
        %270 = vmatprep.subr.mxu0 0.0
        %271 = vmatpush1.msra.mxu0 0.0
        %272 = vmatprep.subr.mxu0 0.0
        %273 = vmatpush1.msra.mxu0 0.0
        %274 = vmatprep.subr.mxu0 0.0
        %275 = vmatpush1.msra.mxu0 0.0
        %276 = vmatprep.mubr.f32.mxu0 0.0
        %v277 = vand.u32 %v199, 4294901760
        %v278 = vsub.f32 %v199, %v277
        %v279 = vand.u32 %v278, 4294901760
        %v280 = vsub.f32 %v278, %v279
        %v281 = vand.u32 %v280, 4294901760
        %282 = vmatmul.mubr.f32.gmra.mrb[0].mxu0 %v281
        %v283 = vpop.f32.mrb[0].mxu0
        %v284 = vadd.f32 0.0, %v283
        %v285 = vpop.f32.mrb[0].mxu0
        %286 = vmatprep.mubr.f32.mxu0 0.0
        %v287 = vand.u32 %v202, 4294901760
        %v288 = vsub.f32 %v202, %v287
        %v289 = vand.u32 %v288, 4294901760
        %v290 = vsub.f32 %v288, %v289
        %v291 = vand.u32 %v290, 4294901760
        %292 = vmatmul.mubr.f32.gmra.mrb[0].mxu0 %v291
        %v293 = vpop.f32.mrb[0].mxu0
        %v294 = vadd.f32 0.0, %v293
        %v295 = vpop.f32.mrb[0].mxu0
        %296 = vmatprep.mubr.f32.mxu0 0.0
        %v297 = vand.u32 %v205, 4294901760
        %v298 = vsub.f32 %v205, %v297
        %v299 = vand.u32 %v298, 4294901760
        %v300 = vsub.f32 %v298, %v299
        %v301 = vand.u32 %v300, 4294901760
        %302 = vmatmul.mubr.f32.gmra.mrb[0].mxu0 %v301
        %v303 = vpop.f32.mrb[0].mxu0
        %v304 = vadd.f32 0.0, %v303
        %v305 = vpop.f32.mrb[0].mxu0
        %306 = vmatprep.mubr.f32.mxu0 0.0
        %v307 = vand.u32 %v208, 4294901760
        %v308 = vsub.f32 %v208, %v307
        %v309 = vand.u32 %v308, 4294901760
        %v310 = vsub.f32 %v308, %v309
        %v311 = vand.u32 %v310, 4294901760
        %312 = vmatmul.mubr.f32.gmra.mrb[0].mxu0 %v311
        %v313 = vpop.f32.mrb[0].mxu0
        %v314 = vadd.f32 0.0, %v313
        %v315 = vpop.f32.mrb[0].mxu0
        %316 = vdwg.mxu0
        %317 = vmatprep.subr.mxu0 0.0
        %v318 = vand.u32 %v195, 4294901760
        %v319 = vsub.f32 %v195, %v318
        %v320 = vand.u32 %v319, 4294901760
        %v321 = vsub.f32 %v319, %v320
        %v322 = vand.u32 %v321, 4294901760
        %323 = vmatpush1.msra.mxu0 %v322
        %324 = vmatprep.subr.mxu0 0.0
        %v325 = vand.u32 %v196, 4294901760
        %v326 = vsub.f32 %v196, %v325
        %v327 = vand.u32 %v326, 4294901760
        %v328 = vsub.f32 %v326, %v327
        %v329 = vand.u32 %v328, 4294901760
        %330 = vmatpush1.msra.mxu0 %v329
        %331 = vmatprep.subr.mxu0 0.0
        %332 = vmatpush1.msra.mxu0 0.0
        %333 = vmatprep.subr.mxu0 0.0
        %334 = vmatpush1.msra.mxu0 0.0
        %335 = vmatprep.subr.mxu0 0.0
        %336 = vmatpush1.msra.mxu0 0.0
        %337 = vmatprep.subr.mxu0 0.0
        %338 = vmatpush1.msra.mxu0 0.0
        %339 = vmatprep.subr.mxu0 0.0
        %340 = vmatpush1.msra.mxu0 0.0
        %341 = vmatprep.subr.mxu0 0.0
        %342 = vmatpush1.msra.mxu0 0.0
        %343 = vmatprep.subr.mxu0 0.0
        %344 = vmatpush1.msra.mxu0 0.0
        %345 = vmatprep.subr.mxu0 0.0
        %346 = vmatpush1.msra.mxu0 0.0
        %347 = vmatprep.subr.mxu0 0.0
        %348 = vmatpush1.msra.mxu0 0.0
        %349 = vmatprep.subr.mxu0 0.0
        %350 = vmatpush1.msra.mxu0 0.0
        %351 = vmatprep.subr.mxu0 0.0
        %352 = vmatpush1.msra.mxu0 0.0
        %353 = vmatprep.subr.mxu0 0.0
        %354 = vmatpush1.msra.mxu0 0.0
        %355 = vmatprep.subr.mxu0 0.0
        %356 = vmatpush1.msra.mxu0 0.0
        %357 = vmatprep.subr.mxu0 0.0
        %358 = vmatpush1.msra.mxu0 0.0
        %359 = vmatprep.subr.mxu0 0.0
        %360 = vmatpush1.msra.mxu0 0.0
        %361 = vmatprep.subr.mxu0 0.0
        %362 = vmatpush1.msra.mxu0 0.0
        %363 = vmatprep.subr.mxu0 0.0
        %364 = vmatpush1.msra.mxu0 0.0
        %365 = vmatprep.subr.mxu0 0.0
        %366 = vmatpush1.msra.mxu0 0.0
        %367 = vmatprep.subr.mxu0 0.0
        %368 = vmatpush1.msra.mxu0 0.0
        %369 = vmatprep.subr.mxu0 0.0
        %370 = vmatpush1.msra.mxu0 0.0
        %371 = vmatprep.subr.mxu0 0.0
        %372 = vmatpush1.msra.mxu0 0.0
        %373 = vmatprep.subr.mxu0 0.0
        %374 = vmatpush1.msra.mxu0 0.0
        %375 = vmatprep.subr.mxu0 0.0
        %376 = vmatpush1.msra.mxu0 0.0
        %377 = vmatprep.subr.mxu0 0.0
        %378 = vmatpush1.msra.mxu0 0.0
        %379 = vmatprep.subr.mxu0 0.0
        %380 = vmatpush1.msra.mxu0 0.0
        %381 = vmatprep.subr.mxu0 0.0
        %382 = vmatpush1.msra.mxu0 0.0
        %383 = vmatprep.subr.mxu0 0.0
        %384 = vmatpush1.msra.mxu0 0.0
        %385 = vmatprep.subr.mxu0 0.0
        %386 = vmatpush1.msra.mxu0 0.0
        %387 = vmatprep.subr.mxu0 0.0
        %388 = vmatpush1.msra.mxu0 0.0
        %389 = vmatprep.subr.mxu0 0.0
        %390 = vmatpush1.msra.mxu0 0.0
        %391 = vmatprep.mubr.f32.mxu0 0.0
        %v392 = vand.u32 %v199, 4294901760
        %393 = vmatmul.mubr.f32.gmra.mrb[0].mxu0 %v392
        %v394 = vpop.f32.mrb[0].mxu0
        %v395 = vadd.f32 %v284, %v394
        %v396 = vpop.f32.mrb[0].mxu0
        %397 = vmatprep.mubr.f32.mxu0 0.0
        %v398 = vand.u32 %v202, 4294901760
        %399 = vmatmul.mubr.f32.gmra.mrb[0].mxu0 %v398
        %v400 = vpop.f32.mrb[0].mxu0
        %v401 = vadd.f32 %v294, %v400
        %v402 = vpop.f32.mrb[0].mxu0
        %403 = vmatprep.mubr.f32.mxu0 0.0
        %v404 = vand.u32 %v205, 4294901760
        %405 = vmatmul.mubr.f32.gmra.mrb[0].mxu0 %v404
        %v406 = vpop.f32.mrb[0].mxu0
        %v407 = vadd.f32 %v304, %v406
        %v408 = vpop.f32.mrb[0].mxu0
        %409 = vmatprep.mubr.f32.mxu0 0.0
        %v410 = vand.u32 %v208, 4294901760
        %411 = vmatmul.mubr.f32.gmra.mrb[0].mxu0 %v410
        %v412 = vpop.f32.mrb[0].mxu0
        %v413 = vadd.f32 %v314, %v412
        %v414 = vpop.f32.mrb[0].mxu0
        %415 = vdwg.mxu0
        %416 = vmatprep.subr.mxu0 0.0
        %v417 = vand.u32 %v195, 4294901760
        %v418 = vsub.f32 %v195, %v417
        %419 = vmatpush1.msra.mxu0 %v418
        %420 = vmatprep.subr.mxu0 0.0
        %v421 = vand.u32 %v196, 4294901760
        %v422 = vsub.f32 %v196, %v421
        %423 = vmatpush1.msra.mxu0 %v422
        %424 = vmatprep.subr.mxu0 0.0
        %425 = vmatpush1.msra.mxu0 0.0
        %426 = vmatprep.subr.mxu0 0.0
        %427 = vmatpush1.msra.mxu0 0.0
        %428 = vmatprep.subr.mxu0 0.0
        %429 = vmatpush1.msra.mxu0 0.0
        %430 = vmatprep.subr.mxu0 0.0
        %431 = vmatpush1.msra.mxu0 0.0
        %432 = vmatprep.subr.mxu0 0.0
        %433 = vmatpush1.msra.mxu0 0.0
        %434 = vmatprep.subr.mxu0 0.0
        %435 = vmatpush1.msra.mxu0 0.0
        %436 = vmatprep.subr.mxu0 0.0
        %437 = vmatpush1.msra.mxu0 0.0
        %438 = vmatprep.subr.mxu0 0.0
        %439 = vmatpush1.msra.mxu0 0.0
        %440 = vmatprep.subr.mxu0 0.0
        %441 = vmatpush1.msra.mxu0 0.0
        %442 = vmatprep.subr.mxu0 0.0
        %443 = vmatpush1.msra.mxu0 0.0
        %444 = vmatprep.subr.mxu0 0.0
        %445 = vmatpush1.msra.mxu0 0.0
        %446 = vmatprep.subr.mxu0 0.0
        %447 = vmatpush1.msra.mxu0 0.0
        %448 = vmatprep.subr.mxu0 0.0
        %449 = vmatpush1.msra.mxu0 0.0
        %450 = vmatprep.subr.mxu0 0.0
        %451 = vmatpush1.msra.mxu0 0.0
        %452 = vmatprep.subr.mxu0 0.0
        %453 = vmatpush1.msra.mxu0 0.0
        %454 = vmatprep.subr.mxu0 0.0
        %455 = vmatpush1.msra.mxu0 0.0
        %456 = vmatprep.subr.mxu0 0.0
        %457 = vmatpush1.msra.mxu0 0.0
        %458 = vmatprep.subr.mxu0 0.0
        %459 = vmatpush1.msra.mxu0 0.0
        %460 = vmatprep.subr.mxu0 0.0
        %461 = vmatpush1.msra.mxu0 0.0
        %462 = vmatprep.subr.mxu0 0.0
        %463 = vmatpush1.msra.mxu0 0.0
        %464 = vmatprep.subr.mxu0 0.0
        %465 = vmatpush1.msra.mxu0 0.0
        %466 = vmatprep.subr.mxu0 0.0
        %467 = vmatpush1.msra.mxu0 0.0
        %468 = vmatprep.subr.mxu0 0.0
        %469 = vmatpush1.msra.mxu0 0.0
        %470 = vmatprep.subr.mxu0 0.0
        %471 = vmatpush1.msra.mxu0 0.0
        %472 = vmatprep.subr.mxu0 0.0
        %473 = vmatpush1.msra.mxu0 0.0
        %474 = vmatprep.subr.mxu0 0.0
        %475 = vmatpush1.msra.mxu0 0.0
        %476 = vmatprep.subr.mxu0 0.0
        %477 = vmatpush1.msra.mxu0 0.0
        %478 = vmatprep.subr.mxu0 0.0
        %479 = vmatpush1.msra.mxu0 0.0
        %480 = vmatprep.subr.mxu0 0.0
        %481 = vmatpush1.msra.mxu0 0.0
        %482 = vmatprep.subr.mxu0 0.0
        %483 = vmatpush1.msra.mxu0 0.0
        %484 = vmatprep.mubr.f32.mxu0 0.0
        %v485 = vand.u32 %v199, 4294901760
        %v486 = vsub.f32 %v199, %v485
        %487 = vmatmul.mubr.f32.gmra.mrb[0].mxu0 %v486
        %v488 = vpop.f32.mrb[0].mxu0
        %v489 = vadd.f32 %v395, %v488
        %v490 = vpop.f32.mrb[0].mxu0
        %491 = vmatprep.mubr.f32.mxu0 0.0
        %v492 = vand.u32 %v202, 4294901760
        %v493 = vsub.f32 %v202, %v492
        %494 = vmatmul.mubr.f32.gmra.mrb[0].mxu0 %v493
        %v495 = vpop.f32.mrb[0].mxu0
        %v496 = vadd.f32 %v401, %v495
        %v497 = vpop.f32.mrb[0].mxu0
        %498 = vmatprep.mubr.f32.mxu0 0.0
        %v499 = vand.u32 %v205, 4294901760
        %v500 = vsub.f32 %v205, %v499
        %501 = vmatmul.mubr.f32.gmra.mrb[0].mxu0 %v500
        %v502 = vpop.f32.mrb[0].mxu0
        %v503 = vadd.f32 %v407, %v502
        %v504 = vpop.f32.mrb[0].mxu0
        %505 = vmatprep.mubr.f32.mxu0 0.0
        %v506 = vand.u32 %v208, 4294901760
        %v507 = vsub.f32 %v208, %v506
        %508 = vmatmul.mubr.f32.gmra.mrb[0].mxu0 %v507
        %v509 = vpop.f32.mrb[0].mxu0
        %v510 = vadd.f32 %v413, %v509
        %v511 = vpop.f32.mrb[0].mxu0
        %512 = vdwg.mxu0
        %513 = vmatprep.subr.mxu0 0.0
        %v514 = vand.u32 %v195, 4294901760
        %515 = vmatpush1.msra.mxu0 %v514
        %516 = vmatprep.subr.mxu0 0.0
        %v517 = vand.u32 %v196, 4294901760
        %518 = vmatpush1.msra.mxu0 %v517
        %519 = vmatprep.subr.mxu0 0.0
        %520 = vmatpush1.msra.mxu0 0.0
        %521 = vmatprep.subr.mxu0 0.0
        %522 = vmatpush1.msra.mxu0 0.0
        %523 = vmatprep.subr.mxu0 0.0
        %524 = vmatpush1.msra.mxu0 0.0
        %525 = vmatprep.subr.mxu0 0.0
        %526 = vmatpush1.msra.mxu0 0.0
        %527 = vmatprep.subr.mxu0 0.0
        %528 = vmatpush1.msra.mxu0 0.0
        %529 = vmatprep.subr.mxu0 0.0
        %530 = vmatpush1.msra.mxu0 0.0
        %531 = vmatprep.subr.mxu0 0.0
        %532 = vmatpush1.msra.mxu0 0.0
        %533 = vmatprep.subr.mxu0 0.0
        %534 = vmatpush1.msra.mxu0 0.0
        %535 = vmatprep.subr.mxu0 0.0
        %536 = vmatpush1.msra.mxu0 0.0
        %537 = vmatprep.subr.mxu0 0.0
        %538 = vmatpush1.msra.mxu0 0.0
        %539 = vmatprep.subr.mxu0 0.0
        %540 = vmatpush1.msra.mxu0 0.0
        %541 = vmatprep.subr.mxu0 0.0
        %542 = vmatpush1.msra.mxu0 0.0
        %543 = vmatprep.subr.mxu0 0.0
        %544 = vmatpush1.msra.mxu0 0.0
        %545 = vmatprep.subr.mxu0 0.0
        %546 = vmatpush1.msra.mxu0 0.0
        %547 = vmatprep.subr.mxu0 0.0
        %548 = vmatpush1.msra.mxu0 0.0
        %549 = vmatprep.subr.mxu0 0.0
        %550 = vmatpush1.msra.mxu0 0.0
        %551 = vmatprep.subr.mxu0 0.0
        %552 = vmatpush1.msra.mxu0 0.0
        %553 = vmatprep.subr.mxu0 0.0
        %554 = vmatpush1.msra.mxu0 0.0
        %555 = vmatprep.subr.mxu0 0.0
        %556 = vmatpush1.msra.mxu0 0.0
        %557 = vmatprep.subr.mxu0 0.0
        %558 = vmatpush1.msra.mxu0 0.0
        %559 = vmatprep.subr.mxu0 0.0
        %560 = vmatpush1.msra.mxu0 0.0
        %561 = vmatprep.subr.mxu0 0.0
        %562 = vmatpush1.msra.mxu0 0.0
        %563 = vmatprep.subr.mxu0 0.0
        %564 = vmatpush1.msra.mxu0 0.0
        %565 = vmatprep.subr.mxu0 0.0
        %566 = vmatpush1.msra.mxu0 0.0
        %567 = vmatprep.subr.mxu0 0.0
        %568 = vmatpush1.msra.mxu0 0.0
        %569 = vmatprep.subr.mxu0 0.0
        %570 = vmatpush1.msra.mxu0 0.0
        %571 = vmatprep.subr.mxu0 0.0
        %572 = vmatpush1.msra.mxu0 0.0
        %573 = vmatprep.subr.mxu0 0.0
        %574 = vmatpush1.msra.mxu0 0.0
        %575 = vmatprep.subr.mxu0 0.0
        %576 = vmatpush1.msra.mxu0 0.0
        %577 = vmatprep.subr.mxu0 0.0
        %578 = vmatpush1.msra.mxu0 0.0
        %579 = vmatprep.mubr.f32.mxu0 0.0
        %v580 = vand.u32 %v199, 4294901760
        %v581 = vsub.f32 %v199, %v580
        %v582 = vand.u32 %v581, 4294901760
        %583 = vmatmul.mubr.f32.gmra.mrb[0].mxu0 %v582
        %v584 = vpop.f32.mrb[0].mxu0
        %v585 = vadd.f32 %v489, %v584
        %v586 = vpop.f32.mrb[0].mxu0
        %587 = vmatprep.mubr.f32.mxu0 0.0
        %v588 = vand.u32 %v202, 4294901760
        %v589 = vsub.f32 %v202, %v588
        %v590 = vand.u32 %v589, 4294901760
        %591 = vmatmul.mubr.f32.gmra.mrb[0].mxu0 %v590
        %v592 = vpop.f32.mrb[0].mxu0
        %v593 = vadd.f32 %v496, %v592
        %v594 = vpop.f32.mrb[0].mxu0
        %595 = vmatprep.mubr.f32.mxu0 0.0
        %v596 = vand.u32 %v205, 4294901760
        %v597 = vsub.f32 %v205, %v596
        %v598 = vand.u32 %v597, 4294901760
        %599 = vmatmul.mubr.f32.gmra.mrb[0].mxu0 %v598
        %v600 = vpop.f32.mrb[0].mxu0
        %v601 = vadd.f32 %v503, %v600
        %v602 = vpop.f32.mrb[0].mxu0
        %603 = vmatprep.mubr.f32.mxu0 0.0
        %v604 = vand.u32 %v208, 4294901760
        %v605 = vsub.f32 %v208, %v604
        %v606 = vand.u32 %v605, 4294901760
        %607 = vmatmul.mubr.f32.gmra.mrb[0].mxu0 %v606
        %v608 = vpop.f32.mrb[0].mxu0
        %v609 = vadd.f32 %v510, %v608
        %v610 = vpop.f32.mrb[0].mxu0
        %611 = vdwg.mxu0
        %612 = vmatprep.subr.mxu0 0.0
        %v613 = vand.u32 %v195, 4294901760
        %v614 = vsub.f32 %v195, %v613
        %v615 = vand.u32 %v614, 4294901760
        %616 = vmatpush1.msra.mxu0 %v615
        %617 = vmatprep.subr.mxu0 0.0
        %v618 = vand.u32 %v196, 4294901760
        %v619 = vsub.f32 %v196, %v618
        %v620 = vand.u32 %v619, 4294901760
        %621 = vmatpush1.msra.mxu0 %v620
        %622 = vmatprep.subr.mxu0 0.0
        %623 = vmatpush1.msra.mxu0 0.0
        %624 = vmatprep.subr.mxu0 0.0
        %625 = vmatpush1.msra.mxu0 0.0
        %626 = vmatprep.subr.mxu0 0.0
        %627 = vmatpush1.msra.mxu0 0.0
        %628 = vmatprep.subr.mxu0 0.0
        %629 = vmatpush1.msra.mxu0 0.0
        %630 = vmatprep.subr.mxu0 0.0
        %631 = vmatpush1.msra.mxu0 0.0
        %632 = vmatprep.subr.mxu0 0.0
        %633 = vmatpush1.msra.mxu0 0.0
        %634 = vmatprep.subr.mxu0 0.0
        %635 = vmatpush1.msra.mxu0 0.0
        %636 = vmatprep.subr.mxu0 0.0
        %637 = vmatpush1.msra.mxu0 0.0
        %638 = vmatprep.subr.mxu0 0.0
        %639 = vmatpush1.msra.mxu0 0.0
        %640 = vmatprep.subr.mxu0 0.0
        %641 = vmatpush1.msra.mxu0 0.0
        %642 = vmatprep.subr.mxu0 0.0
        %643 = vmatpush1.msra.mxu0 0.0
        %644 = vmatprep.subr.mxu0 0.0
        %645 = vmatpush1.msra.mxu0 0.0
        %646 = vmatprep.subr.mxu0 0.0
        %647 = vmatpush1.msra.mxu0 0.0
        %648 = vmatprep.subr.mxu0 0.0
        %649 = vmatpush1.msra.mxu0 0.0
        %650 = vmatprep.subr.mxu0 0.0
        %651 = vmatpush1.msra.mxu0 0.0
        %652 = vmatprep.subr.mxu0 0.0
        %653 = vmatpush1.msra.mxu0 0.0
        %654 = vmatprep.subr.mxu0 0.0
        %655 = vmatpush1.msra.mxu0 0.0
        %656 = vmatprep.subr.mxu0 0.0
        %657 = vmatpush1.msra.mxu0 0.0
        %658 = vmatprep.subr.mxu0 0.0
        %659 = vmatpush1.msra.mxu0 0.0
        %660 = vmatprep.subr.mxu0 0.0
        %661 = vmatpush1.msra.mxu0 0.0
        %662 = vmatprep.subr.mxu0 0.0
        %663 = vmatpush1.msra.mxu0 0.0
        %664 = vmatprep.subr.mxu0 0.0
        %665 = vmatpush1.msra.mxu0 0.0
        %666 = vmatprep.subr.mxu0 0.0
        %667 = vmatpush1.msra.mxu0 0.0
        %668 = vmatprep.subr.mxu0 0.0
        %669 = vmatpush1.msra.mxu0 0.0
        %670 = vmatprep.subr.mxu0 0.0
        %671 = vmatpush1.msra.mxu0 0.0
        %672 = vmatprep.subr.mxu0 0.0
        %673 = vmatpush1.msra.mxu0 0.0
        %674 = vmatprep.subr.mxu0 0.0
        %675 = vmatpush1.msra.mxu0 0.0
        %676 = vmatprep.subr.mxu0 0.0
        %677 = vmatpush1.msra.mxu0 0.0
        %678 = vmatprep.subr.mxu0 0.0
        %679 = vmatpush1.msra.mxu0 0.0
        %680 = vmatprep.subr.mxu0 0.0
        %681 = vmatpush1.msra.mxu0 0.0
        %682 = vmatprep.mubr.f32.mxu0 0.0
        %v683 = vand.u32 %v199, 4294901760
        %684 = vmatmul.mubr.f32.gmra.mrb[0].mxu0 %v683
        %v685 = vpop.f32.mrb[0].mxu0
        %v686 = vadd.f32 %v585, %v685
        %v687 = vpop.f32.mrb[0].mxu0
        %688 = vmatprep.mubr.f32.mxu0 0.0
        %v689 = vand.u32 %v202, 4294901760
        %690 = vmatmul.mubr.f32.gmra.mrb[0].mxu0 %v689
        %v691 = vpop.f32.mrb[0].mxu0
        %v692 = vadd.f32 %v593, %v691
        %v693 = vpop.f32.mrb[0].mxu0
        %694 = vmatprep.mubr.f32.mxu0 0.0
        %v695 = vand.u32 %v205, 4294901760
        %696 = vmatmul.mubr.f32.gmra.mrb[0].mxu0 %v695
        %v697 = vpop.f32.mrb[0].mxu0
        %v698 = vadd.f32 %v601, %v697
        %v699 = vpop.f32.mrb[0].mxu0
        %700 = vmatprep.mubr.f32.mxu0 0.0
        %v701 = vand.u32 %v208, 4294901760
        %702 = vmatmul.mubr.f32.gmra.mrb[0].mxu0 %v701
        %v703 = vpop.f32.mrb[0].mxu0
        %v704 = vadd.f32 %v609, %v703
        %v705 = vpop.f32.mrb[0].mxu0
        %706 = vdwg.mxu0
        %707 = vmatprep.subr.mxu0 0.0
        %v708 = vand.u32 %v195, 4294901760
        %709 = vmatpush1.msra.mxu0 %v708
        %710 = vmatprep.subr.mxu0 0.0
        %v711 = vand.u32 %v196, 4294901760
        %712 = vmatpush1.msra.mxu0 %v711
        %713 = vmatprep.subr.mxu0 0.0
        %714 = vmatpush1.msra.mxu0 0.0
        %715 = vmatprep.subr.mxu0 0.0
        %716 = vmatpush1.msra.mxu0 0.0
        %717 = vmatprep.subr.mxu0 0.0
        %718 = vmatpush1.msra.mxu0 0.0
        %719 = vmatprep.subr.mxu0 0.0
        %720 = vmatpush1.msra.mxu0 0.0
        %721 = vmatprep.subr.mxu0 0.0
        %722 = vmatpush1.msra.mxu0 0.0
        %723 = vmatprep.subr.mxu0 0.0
        %724 = vmatpush1.msra.mxu0 0.0
        %725 = vmatprep.subr.mxu0 0.0
        %726 = vmatpush1.msra.mxu0 0.0
        %727 = vmatprep.subr.mxu0 0.0
        %728 = vmatpush1.msra.mxu0 0.0
        %729 = vmatprep.subr.mxu0 0.0
        %730 = vmatpush1.msra.mxu0 0.0
        %731 = vmatprep.subr.mxu0 0.0
        %732 = vmatpush1.msra.mxu0 0.0
        %733 = vmatprep.subr.mxu0 0.0
        %734 = vmatpush1.msra.mxu0 0.0
        %735 = vmatprep.subr.mxu0 0.0
        %736 = vmatpush1.msra.mxu0 0.0
        %737 = vmatprep.subr.mxu0 0.0
        %738 = vmatpush1.msra.mxu0 0.0
        %739 = vmatprep.subr.mxu0 0.0
        %740 = vmatpush1.msra.mxu0 0.0
        %741 = vmatprep.subr.mxu0 0.0
        %742 = vmatpush1.msra.mxu0 0.0
        %743 = vmatprep.subr.mxu0 0.0
        %744 = vmatpush1.msra.mxu0 0.0
        %745 = vmatprep.subr.mxu0 0.0
        %746 = vmatpush1.msra.mxu0 0.0
        %747 = vmatprep.subr.mxu0 0.0
        %748 = vmatpush1.msra.mxu0 0.0
        %749 = vmatprep.subr.mxu0 0.0
        %750 = vmatpush1.msra.mxu0 0.0
        %751 = vmatprep.subr.mxu0 0.0
        %752 = vmatpush1.msra.mxu0 0.0
        %753 = vmatprep.subr.mxu0 0.0
        %754 = vmatpush1.msra.mxu0 0.0
        %755 = vmatprep.subr.mxu0 0.0
        %756 = vmatpush1.msra.mxu0 0.0
        %757 = vmatprep.subr.mxu0 0.0
        %758 = vmatpush1.msra.mxu0 0.0
        %759 = vmatprep.subr.mxu0 0.0
        %760 = vmatpush1.msra.mxu0 0.0
        %761 = vmatprep.subr.mxu0 0.0
        %762 = vmatpush1.msra.mxu0 0.0
        %763 = vmatprep.subr.mxu0 0.0
        %764 = vmatpush1.msra.mxu0 0.0
        %765 = vmatprep.subr.mxu0 0.0
        %766 = vmatpush1.msra.mxu0 0.0
        %767 = vmatprep.subr.mxu0 0.0
        %768 = vmatpush1.msra.mxu0 0.0
        %769 = vmatprep.subr.mxu0 0.0
        %770 = vmatpush1.msra.mxu0 0.0
        %771 = vmatprep.subr.mxu0 0.0
        %772 = vmatpush1.msra.mxu0 0.0
        %773 = vmatprep.mubr.f32.mxu0 0.0
        %v774 = vand.u32 %v199, 4294901760
        %775 = vmatmul.mubr.f32.gmra.mrb[0].mxu0 %v774
        %v776 = vpop.f32.mrb[0].mxu0
        %v777 = vadd.f32 %v686, %v776
        %v778 = vpop.f32.mrb[0].mxu0
        %779 = vmatprep.mubr.f32.mxu0 0.0
        %v780 = vand.u32 %v202, 4294901760
        %781 = vmatmul.mubr.f32.gmra.mrb[0].mxu0 %v780
        %v782 = vpop.f32.mrb[0].mxu0
        %v783 = vadd.f32 %v692, %v782
        %v784 = vpop.f32.mrb[0].mxu0
        %785 = vmatprep.mubr.f32.mxu0 0.0
        %v786 = vand.u32 %v205, 4294901760
        %787 = vmatmul.mubr.f32.gmra.mrb[0].mxu0 %v786
        %v788 = vpop.f32.mrb[0].mxu0
        %v789 = vadd.f32 %v698, %v788
        %v790 = vpop.f32.mrb[0].mxu0
        %791 = vmatprep.mubr.f32.mxu0 0.0
        %v792 = vand.u32 %v208, 4294901760
        %793 = vmatmul.mubr.f32.gmra.mrb[0].mxu0 %v792
        %v794 = vpop.f32.mrb[0].mxu0
        %v795 = vadd.f32 %v704, %v794
        %v796 = vpop.f32.mrb[0].mxu0
        %797 = vdwg.mxu0
        %vm798 = vcmask 261120
        %799 = vst.msk [vmem:[#allocation2] sm:$0xff] %vm798, %v777
        %800 = vst.msk [vmem:[#allocation2 + $0x8] sm:$0xff] %vm798, %v783
        %801 = vst.msk [vmem:[#allocation2 + $0x10] sm:$0xff] %vm798, %v789
        %802 = vst.msk [vmem:[#allocation2 + $0x18] sm:$0xff] %vm798, %v795
        %v803 = vld [vmem:[%s2] sm:$0xff]
        %v804 = vld [vmem:[%s2 + $0x8] sm:$0xff]
        %v805 = vld [vmem:[%s2 + $0x10] sm:$0xff]
        %v806 = vld [vmem:[%s2 + $0x18] sm:$0xff]
        %v807 = vld [vmem:[#allocation2] sm:$0xff]
        %v808 = vld [vmem:[#allocation2 + $0x8] sm:$0xff]
        %v810 = vsel %vm197, %v803, 0
        %v813 = vsel %vm197, %v804, 0
        %v816 = vsel %vm197, %v805, 0
        %v819 = vsel %vm197, %v806, 0
        %821 = vmatprep.subr.mxu0 0.0
        %v822 = vand.u32 %v807, 4294901760
        %823 = vmatpush1.msra.mxu0 %v822
        %824 = vmatprep.subr.mxu0 0.0
        %v825 = vand.u32 %v808, 4294901760
        %826 = vmatpush1.msra.mxu0 %v825
        %827 = vmatprep.subr.mxu0 0.0
        %828 = vmatpush1.msra.mxu0 0.0
        %829 = vmatprep.subr.mxu0 0.0
        %830 = vmatpush1.msra.mxu0 0.0
        %831 = vmatprep.subr.mxu0 0.0
        %832 = vmatpush1.msra.mxu0 0.0
        %833 = vmatprep.subr.mxu0 0.0
        %834 = vmatpush1.msra.mxu0 0.0
        %835 = vmatprep.subr.mxu0 0.0
        %836 = vmatpush1.msra.mxu0 0.0
        %837 = vmatprep.subr.mxu0 0.0
        %838 = vmatpush1.msra.mxu0 0.0
        %839 = vmatprep.subr.mxu0 0.0
        %840 = vmatpush1.msra.mxu0 0.0
        %841 = vmatprep.subr.mxu0 0.0
        %842 = vmatpush1.msra.mxu0 0.0
        %843 = vmatprep.subr.mxu0 0.0
        %844 = vmatpush1.msra.mxu0 0.0
        %845 = vmatprep.subr.mxu0 0.0
        %846 = vmatpush1.msra.mxu0 0.0
        %847 = vmatprep.subr.mxu0 0.0
        %848 = vmatpush1.msra.mxu0 0.0
        %849 = vmatprep.subr.mxu0 0.0
        %850 = vmatpush1.msra.mxu0 0.0
        %851 = vmatprep.subr.mxu0 0.0
        %852 = vmatpush1.msra.mxu0 0.0
        %853 = vmatprep.subr.mxu0 0.0
        %854 = vmatpush1.msra.mxu0 0.0
        %855 = vmatprep.subr.mxu0 0.0
        %856 = vmatpush1.msra.mxu0 0.0
        %857 = vmatprep.subr.mxu0 0.0
        %858 = vmatpush1.msra.mxu0 0.0
        %859 = vmatprep.subr.mxu0 0.0
        %860 = vmatpush1.msra.mxu0 0.0
        %861 = vmatprep.subr.mxu0 0.0
        %862 = vmatpush1.msra.mxu0 0.0
        %863 = vmatprep.subr.mxu0 0.0
        %864 = vmatpush1.msra.mxu0 0.0
        %865 = vmatprep.subr.mxu0 0.0
        %866 = vmatpush1.msra.mxu0 0.0
        %867 = vmatprep.subr.mxu0 0.0
        %868 = vmatpush1.msra.mxu0 0.0
        %869 = vmatprep.subr.mxu0 0.0
        %870 = vmatpush1.msra.mxu0 0.0
        %871 = vmatprep.subr.mxu0 0.0
        %872 = vmatpush1.msra.mxu0 0.0
        %873 = vmatprep.subr.mxu0 0.0
        %874 = vmatpush1.msra.mxu0 0.0
        %875 = vmatprep.subr.mxu0 0.0
        %876 = vmatpush1.msra.mxu0 0.0
        %877 = vmatprep.subr.mxu0 0.0
        %878 = vmatpush1.msra.mxu0 0.0
        %879 = vmatprep.subr.mxu0 0.0
        %880 = vmatpush1.msra.mxu0 0.0
        %881 = vmatprep.subr.mxu0 0.0
        %882 = vmatpush1.msra.mxu0 0.0
        %883 = vmatprep.subr.mxu0 0.0
        %884 = vmatpush1.msra.mxu0 0.0
        %885 = vmatprep.subr.mxu0 0.0
        %886 = vmatpush1.msra.mxu0 0.0
        %887 = vmatprep.mubr.f32.mxu0 0.0
        %v888 = vand.u32 %v810, 4294901760
        %v889 = vsub.f32 %v810, %v888
        %v890 = vand.u32 %v889, 4294901760
        %v891 = vsub.f32 %v889, %v890
        %v892 = vand.u32 %v891, 4294901760
        %893 = vmatmul.mubr.f32.gmra.mrb[0].mxu0 %v892
        %v894 = vpop.f32.mrb[0].mxu0
        %v895 = vadd.f32 0.0, %v894
        %v896 = vpop.f32.mrb[0].mxu0
        %897 = vmatprep.mubr.f32.mxu0 0.0
        %v898 = vand.u32 %v813, 4294901760
        %v899 = vsub.f32 %v813, %v898
        %v900 = vand.u32 %v899, 4294901760
        %v901 = vsub.f32 %v899, %v900
        %v902 = vand.u32 %v901, 4294901760
        %903 = vmatmul.mubr.f32.gmra.mrb[0].mxu0 %v902
        %v904 = vpop.f32.mrb[0].mxu0
        %v905 = vadd.f32 0.0, %v904
        %v906 = vpop.f32.mrb[0].mxu0
        %907 = vmatprep.mubr.f32.mxu0 0.0
        %v908 = vand.u32 %v816, 4294901760
        %v909 = vsub.f32 %v816, %v908
        %v910 = vand.u32 %v909, 4294901760
        %v911 = vsub.f32 %v909, %v910
        %v912 = vand.u32 %v911, 4294901760
        %913 = vmatmul.mubr.f32.gmra.mrb[0].mxu0 %v912
        %v914 = vpop.f32.mrb[0].mxu0
        %v915 = vadd.f32 0.0, %v914
        %v916 = vpop.f32.mrb[0].mxu0
        %917 = vmatprep.mubr.f32.mxu0 0.0
        %v918 = vand.u32 %v819, 4294901760
        %v919 = vsub.f32 %v819, %v918
        %v920 = vand.u32 %v919, 4294901760
        %v921 = vsub.f32 %v919, %v920
        %v922 = vand.u32 %v921, 4294901760
        %923 = vmatmul.mubr.f32.gmra.mrb[0].mxu0 %v922
        %v924 = vpop.f32.mrb[0].mxu0
        %v925 = vadd.f32 0.0, %v924
        %v926 = vpop.f32.mrb[0].mxu0
        %927 = vdwg.mxu0
        %928 = vmatprep.subr.mxu0 0.0
        %v929 = vand.u32 %v807, 4294901760
        %v930 = vsub.f32 %v807, %v929
        %v931 = vand.u32 %v930, 4294901760
        %v932 = vsub.f32 %v930, %v931
        %v933 = vand.u32 %v932, 4294901760
        %934 = vmatpush1.msra.mxu0 %v933
        %935 = vmatprep.subr.mxu0 0.0
        %v936 = vand.u32 %v808, 4294901760
        %v937 = vsub.f32 %v808, %v936
        %v938 = vand.u32 %v937, 4294901760
        %v939 = vsub.f32 %v937, %v938
        %v940 = vand.u32 %v939, 4294901760
        %941 = vmatpush1.msra.mxu0 %v940
        %942 = vmatprep.subr.mxu0 0.0
        %943 = vmatpush1.msra.mxu0 0.0
        %944 = vmatprep.subr.mxu0 0.0
        %945 = vmatpush1.msra.mxu0 0.0
        %946 = vmatprep.subr.mxu0 0.0
        %947 = vmatpush1.msra.mxu0 0.0
        %948 = vmatprep.subr.mxu0 0.0
        %949 = vmatpush1.msra.mxu0 0.0
        %950 = vmatprep.subr.mxu0 0.0
        %951 = vmatpush1.msra.mxu0 0.0
        %952 = vmatprep.subr.mxu0 0.0
        %953 = vmatpush1.msra.mxu0 0.0
        %954 = vmatprep.subr.mxu0 0.0
        %955 = vmatpush1.msra.mxu0 0.0
        %956 = vmatprep.subr.mxu0 0.0
        %957 = vmatpush1.msra.mxu0 0.0
        %958 = vmatprep.subr.mxu0 0.0
        %959 = vmatpush1.msra.mxu0 0.0
        %960 = vmatprep.subr.mxu0 0.0
        %961 = vmatpush1.msra.mxu0 0.0
        %962 = vmatprep.subr.mxu0 0.0
        %963 = vmatpush1.msra.mxu0 0.0
        %964 = vmatprep.subr.mxu0 0.0
        %965 = vmatpush1.msra.mxu0 0.0
        %966 = vmatprep.subr.mxu0 0.0
        %967 = vmatpush1.msra.mxu0 0.0
        %968 = vmatprep.subr.mxu0 0.0
        %969 = vmatpush1.msra.mxu0 0.0
        %970 = vmatprep.subr.mxu0 0.0
        %971 = vmatpush1.msra.mxu0 0.0
        %972 = vmatprep.subr.mxu0 0.0
        %973 = vmatpush1.msra.mxu0 0.0
        %974 = vmatprep.subr.mxu0 0.0
        %975 = vmatpush1.msra.mxu0 0.0
        %976 = vmatprep.subr.mxu0 0.0
        %977 = vmatpush1.msra.mxu0 0.0
        %978 = vmatprep.subr.mxu0 0.0
        %979 = vmatpush1.msra.mxu0 0.0
        %980 = vmatprep.subr.mxu0 0.0
        %981 = vmatpush1.msra.mxu0 0.0
        %982 = vmatprep.subr.mxu0 0.0
        %983 = vmatpush1.msra.mxu0 0.0
        %984 = vmatprep.subr.mxu0 0.0
        %985 = vmatpush1.msra.mxu0 0.0
        %986 = vmatprep.subr.mxu0 0.0
        %987 = vmatpush1.msra.mxu0 0.0
        %988 = vmatprep.subr.mxu0 0.0
        %989 = vmatpush1.msra.mxu0 0.0
        %990 = vmatprep.subr.mxu0 0.0
        %991 = vmatpush1.msra.mxu0 0.0
        %992 = vmatprep.subr.mxu0 0.0
        %993 = vmatpush1.msra.mxu0 0.0
        %994 = vmatprep.subr.mxu0 0.0
        %995 = vmatpush1.msra.mxu0 0.0
        %996 = vmatprep.subr.mxu0 0.0
        %997 = vmatpush1.msra.mxu0 0.0
        %998 = vmatprep.subr.mxu0 0.0
        %999 = vmatpush1.msra.mxu0 0.0
        %1000 = vmatprep.subr.mxu0 0.0
        %1001 = vmatpush1.msra.mxu0 0.0
        %1002 = vmatprep.mubr.f32.mxu0 0.0
        %v1003 = vand.u32 %v810, 4294901760
        %1004 = vmatmul.mubr.f32.gmra.mrb[0].mxu0 %v1003
        %v1005 = vpop.f32.mrb[0].mxu0
        %v1006 = vadd.f32 %v895, %v1005
        %v1007 = vpop.f32.mrb[0].mxu0
        %1008 = vmatprep.mubr.f32.mxu0 0.0
        %v1009 = vand.u32 %v813, 4294901760
        %1010 = vmatmul.mubr.f32.gmra.mrb[0].mxu0 %v1009
        %v1011 = vpop.f32.mrb[0].mxu0
        %v1012 = vadd.f32 %v905, %v1011
        %v1013 = vpop.f32.mrb[0].mxu0
        %1014 = vmatprep.mubr.f32.mxu0 0.0
        %v1015 = vand.u32 %v816, 4294901760
        %1016 = vmatmul.mubr.f32.gmra.mrb[0].mxu0 %v1015
        %v1017 = vpop.f32.mrb[0].mxu0
        %v1018 = vadd.f32 %v915, %v1017
        %v1019 = vpop.f32.mrb[0].mxu0
        %1020 = vmatprep.mubr.f32.mxu0 0.0
        %v1021 = vand.u32 %v819, 4294901760
        %1022 = vmatmul.mubr.f32.gmra.mrb[0].mxu0 %v1021
        %v1023 = vpop.f32.mrb[0].mxu0
        %v1024 = vadd.f32 %v925, %v1023
        %v1025 = vpop.f32.mrb[0].mxu0
        %1026 = vdwg.mxu0
        %1027 = vmatprep.subr.mxu0 0.0
        %v1028 = vand.u32 %v807, 4294901760
        %v1029 = vsub.f32 %v807, %v1028
        %1030 = vmatpush1.msra.mxu0 %v1029
        %1031 = vmatprep.subr.mxu0 0.0
        %v1032 = vand.u32 %v808, 4294901760
        %v1033 = vsub.f32 %v808, %v1032
        %1034 = vmatpush1.msra.mxu0 %v1033
        %1035 = vmatprep.subr.mxu0 0.0
        %1036 = vmatpush1.msra.mxu0 0.0
        %1037 = vmatprep.subr.mxu0 0.0
        %1038 = vmatpush1.msra.mxu0 0.0
        %1039 = vmatprep.subr.mxu0 0.0
        %1040 = vmatpush1.msra.mxu0 0.0
        %1041 = vmatprep.subr.mxu0 0.0
        %1042 = vmatpush1.msra.mxu0 0.0
        %1043 = vmatprep.subr.mxu0 0.0
        %1044 = vmatpush1.msra.mxu0 0.0
        %1045 = vmatprep.subr.mxu0 0.0
        %1046 = vmatpush1.msra.mxu0 0.0
        %1047 = vmatprep.subr.mxu0 0.0
        %1048 = vmatpush1.msra.mxu0 0.0
        %1049 = vmatprep.subr.mxu0 0.0
        %1050 = vmatpush1.msra.mxu0 0.0
        %1051 = vmatprep.subr.mxu0 0.0
        %1052 = vmatpush1.msra.mxu0 0.0
        %1053 = vmatprep.subr.mxu0 0.0
        %1054 = vmatpush1.msra.mxu0 0.0
        %1055 = vmatprep.subr.mxu0 0.0
        %1056 = vmatpush1.msra.mxu0 0.0
        %1057 = vmatprep.subr.mxu0 0.0
        %1058 = vmatpush1.msra.mxu0 0.0
        %1059 = vmatprep.subr.mxu0 0.0
        %1060 = vmatpush1.msra.mxu0 0.0
        %1061 = vmatprep.subr.mxu0 0.0
        %1062 = vmatpush1.msra.mxu0 0.0
        %1063 = vmatprep.subr.mxu0 0.0
        %1064 = vmatpush1.msra.mxu0 0.0
        %1065 = vmatprep.subr.mxu0 0.0
        %1066 = vmatpush1.msra.mxu0 0.0
        %1067 = vmatprep.subr.mxu0 0.0
        %1068 = vmatpush1.msra.mxu0 0.0
        %1069 = vmatprep.subr.mxu0 0.0
        %1070 = vmatpush1.msra.mxu0 0.0
        %1071 = vmatprep.subr.mxu0 0.0
        %1072 = vmatpush1.msra.mxu0 0.0
        %1073 = vmatprep.subr.mxu0 0.0
        %1074 = vmatpush1.msra.mxu0 0.0
        %1075 = vmatprep.subr.mxu0 0.0
        %1076 = vmatpush1.msra.mxu0 0.0
        %1077 = vmatprep.subr.mxu0 0.0
        %1078 = vmatpush1.msra.mxu0 0.0
        %1079 = vmatprep.subr.mxu0 0.0
        %1080 = vmatpush1.msra.mxu0 0.0
        %1081 = vmatprep.subr.mxu0 0.0
        %1082 = vmatpush1.msra.mxu0 0.0
        %1083 = vmatprep.subr.mxu0 0.0
        %1084 = vmatpush1.msra.mxu0 0.0
        %1085 = vmatprep.subr.mxu0 0.0
        %1086 = vmatpush1.msra.mxu0 0.0
        %1087 = vmatprep.subr.mxu0 0.0
        %1088 = vmatpush1.msra.mxu0 0.0
        %1089 = vmatprep.subr.mxu0 0.0
        %1090 = vmatpush1.msra.mxu0 0.0
        %1091 = vmatprep.subr.mxu0 0.0
        %1092 = vmatpush1.msra.mxu0 0.0
        %1093 = vmatprep.subr.mxu0 0.0
        %1094 = vmatpush1.msra.mxu0 0.0
        %1095 = vmatprep.mubr.f32.mxu0 0.0
        %v1096 = vand.u32 %v810, 4294901760
        %v1097 = vsub.f32 %v810, %v1096
        %1098 = vmatmul.mubr.f32.gmra.mrb[0].mxu0 %v1097
        %v1099 = vpop.f32.mrb[0].mxu0
        %v1100 = vadd.f32 %v1006, %v1099
        %v1101 = vpop.f32.mrb[0].mxu0
        %1102 = vmatprep.mubr.f32.mxu0 0.0
        %v1103 = vand.u32 %v813, 4294901760
        %v1104 = vsub.f32 %v813, %v1103
        %1105 = vmatmul.mubr.f32.gmra.mrb[0].mxu0 %v1104
        %v1106 = vpop.f32.mrb[0].mxu0
        %v1107 = vadd.f32 %v1012, %v1106
        %v1108 = vpop.f32.mrb[0].mxu0
        %1109 = vmatprep.mubr.f32.mxu0 0.0
        %v1110 = vand.u32 %v816, 4294901760
        %v1111 = vsub.f32 %v816, %v1110
        %1112 = vmatmul.mubr.f32.gmra.mrb[0].mxu0 %v1111
        %v1113 = vpop.f32.mrb[0].mxu0
        %v1114 = vadd.f32 %v1018, %v1113
        %v1115 = vpop.f32.mrb[0].mxu0
        %1116 = vmatprep.mubr.f32.mxu0 0.0
        %v1117 = vand.u32 %v819, 4294901760
        %v1118 = vsub.f32 %v819, %v1117
        %1119 = vmatmul.mubr.f32.gmra.mrb[0].mxu0 %v1118
        %v1120 = vpop.f32.mrb[0].mxu0
        %v1121 = vadd.f32 %v1024, %v1120
        %v1122 = vpop.f32.mrb[0].mxu0
        %1123 = vdwg.mxu0
        %1124 = vmatprep.subr.mxu0 0.0
        %v1125 = vand.u32 %v807, 4294901760
        %1126 = vmatpush1.msra.mxu0 %v1125
        %1127 = vmatprep.subr.mxu0 0.0
        %v1128 = vand.u32 %v808, 4294901760
        %1129 = vmatpush1.msra.mxu0 %v1128
        %1130 = vmatprep.subr.mxu0 0.0
        %1131 = vmatpush1.msra.mxu0 0.0
        %1132 = vmatprep.subr.mxu0 0.0
        %1133 = vmatpush1.msra.mxu0 0.0
        %1134 = vmatprep.subr.mxu0 0.0
        %1135 = vmatpush1.msra.mxu0 0.0
        %1136 = vmatprep.subr.mxu0 0.0
        %1137 = vmatpush1.msra.mxu0 0.0
        %1138 = vmatprep.subr.mxu0 0.0
        %1139 = vmatpush1.msra.mxu0 0.0
        %1140 = vmatprep.subr.mxu0 0.0
        %1141 = vmatpush1.msra.mxu0 0.0
        %1142 = vmatprep.subr.mxu0 0.0
        %1143 = vmatpush1.msra.mxu0 0.0
        %1144 = vmatprep.subr.mxu0 0.0
        %1145 = vmatpush1.msra.mxu0 0.0
        %1146 = vmatprep.subr.mxu0 0.0
        %1147 = vmatpush1.msra.mxu0 0.0
        %1148 = vmatprep.subr.mxu0 0.0
        %1149 = vmatpush1.msra.mxu0 0.0
        %1150 = vmatprep.subr.mxu0 0.0
        %1151 = vmatpush1.msra.mxu0 0.0
        %1152 = vmatprep.subr.mxu0 0.0
        %1153 = vmatpush1.msra.mxu0 0.0
        %1154 = vmatprep.subr.mxu0 0.0
        %1155 = vmatpush1.msra.mxu0 0.0
        %1156 = vmatprep.subr.mxu0 0.0
        %1157 = vmatpush1.msra.mxu0 0.0
        %1158 = vmatprep.subr.mxu0 0.0
        %1159 = vmatpush1.msra.mxu0 0.0
        %1160 = vmatprep.subr.mxu0 0.0
        %1161 = vmatpush1.msra.mxu0 0.0
        %1162 = vmatprep.subr.mxu0 0.0
        %1163 = vmatpush1.msra.mxu0 0.0
        %1164 = vmatprep.subr.mxu0 0.0
        %1165 = vmatpush1.msra.mxu0 0.0
        %1166 = vmatprep.subr.mxu0 0.0
        %1167 = vmatpush1.msra.mxu0 0.0
        %1168 = vmatprep.subr.mxu0 0.0
        %1169 = vmatpush1.msra.mxu0 0.0
        %1170 = vmatprep.subr.mxu0 0.0
        %1171 = vmatpush1.msra.mxu0 0.0
        %1172 = vmatprep.subr.mxu0 0.0
        %1173 = vmatpush1.msra.mxu0 0.0
        %1174 = vmatprep.subr.mxu0 0.0
        %1175 = vmatpush1.msra.mxu0 0.0
        %1176 = vmatprep.subr.mxu0 0.0
        %1177 = vmatpush1.msra.mxu0 0.0
        %1178 = vmatprep.subr.mxu0 0.0
        %1179 = vmatpush1.msra.mxu0 0.0
        %1180 = vmatprep.subr.mxu0 0.0
        %1181 = vmatpush1.msra.mxu0 0.0
        %1182 = vmatprep.subr.mxu0 0.0
        %1183 = vmatpush1.msra.mxu0 0.0
        %1184 = vmatprep.subr.mxu0 0.0
        %1185 = vmatpush1.msra.mxu0 0.0
        %1186 = vmatprep.subr.mxu0 0.0
        %1187 = vmatpush1.msra.mxu0 0.0
        %1188 = vmatprep.subr.mxu0 0.0
        %1189 = vmatpush1.msra.mxu0 0.0
        %1190 = vmatprep.mubr.f32.mxu0 0.0
        %v1191 = vand.u32 %v810, 4294901760
        %v1192 = vsub.f32 %v810, %v1191
        %v1193 = vand.u32 %v1192, 4294901760
        %1194 = vmatmul.mubr.f32.gmra.mrb[0].mxu0 %v1193
        %v1195 = vpop.f32.mrb[0].mxu0
        %v1196 = vadd.f32 %v1100, %v1195
        %v1197 = vpop.f32.mrb[0].mxu0
        %1198 = vmatprep.mubr.f32.mxu0 0.0
        %v1199 = vand.u32 %v813, 4294901760
        %v1200 = vsub.f32 %v813, %v1199
        %v1201 = vand.u32 %v1200, 4294901760
        %1202 = vmatmul.mubr.f32.gmra.mrb[0].mxu0 %v1201
        %v1203 = vpop.f32.mrb[0].mxu0
        %v1204 = vadd.f32 %v1107, %v1203
        %v1205 = vpop.f32.mrb[0].mxu0
        %1206 = vmatprep.mubr.f32.mxu0 0.0
        %v1207 = vand.u32 %v816, 4294901760
        %v1208 = vsub.f32 %v816, %v1207
        %v1209 = vand.u32 %v1208, 4294901760
        %1210 = vmatmul.mubr.f32.gmra.mrb[0].mxu0 %v1209
        %v1211 = vpop.f32.mrb[0].mxu0
        %v1212 = vadd.f32 %v1114, %v1211
        %v1213 = vpop.f32.mrb[0].mxu0
        %1214 = vmatprep.mubr.f32.mxu0 0.0
        %v1215 = vand.u32 %v819, 4294901760
        %v1216 = vsub.f32 %v819, %v1215
        %v1217 = vand.u32 %v1216, 4294901760
        %1218 = vmatmul.mubr.f32.gmra.mrb[0].mxu0 %v1217
        %v1219 = vpop.f32.mrb[0].mxu0
        %v1220 = vadd.f32 %v1121, %v1219
        %v1221 = vpop.f32.mrb[0].mxu0
        %1222 = vdwg.mxu0
        %1223 = vmatprep.subr.mxu0 0.0
        %v1224 = vand.u32 %v807, 4294901760
        %v1225 = vsub.f32 %v807, %v1224
        %v1226 = vand.u32 %v1225, 4294901760
        %1227 = vmatpush1.msra.mxu0 %v1226
        %1228 = vmatprep.subr.mxu0 0.0
        %v1229 = vand.u32 %v808, 4294901760
        %v1230 = vsub.f32 %v808, %v1229
        %v1231 = vand.u32 %v1230, 4294901760
        %1232 = vmatpush1.msra.mxu0 %v1231
        %1233 = vmatprep.subr.mxu0 0.0
        %1234 = vmatpush1.msra.mxu0 0.0
        %1235 = vmatprep.subr.mxu0 0.0
        %1236 = vmatpush1.msra.mxu0 0.0
        %1237 = vmatprep.subr.mxu0 0.0
        %1238 = vmatpush1.msra.mxu0 0.0
        %1239 = vmatprep.subr.mxu0 0.0
        %1240 = vmatpush1.msra.mxu0 0.0
        %1241 = vmatprep.subr.mxu0 0.0
        %1242 = vmatpush1.msra.mxu0 0.0
        %1243 = vmatprep.subr.mxu0 0.0
        %1244 = vmatpush1.msra.mxu0 0.0
        %1245 = vmatprep.subr.mxu0 0.0
        %1246 = vmatpush1.msra.mxu0 0.0
        %1247 = vmatprep.subr.mxu0 0.0
        %1248 = vmatpush1.msra.mxu0 0.0
        %1249 = vmatprep.subr.mxu0 0.0
        %1250 = vmatpush1.msra.mxu0 0.0
        %1251 = vmatprep.subr.mxu0 0.0
        %1252 = vmatpush1.msra.mxu0 0.0
        %1253 = vmatprep.subr.mxu0 0.0
        %1254 = vmatpush1.msra.mxu0 0.0
        %1255 = vmatprep.subr.mxu0 0.0
        %1256 = vmatpush1.msra.mxu0 0.0
        %1257 = vmatprep.subr.mxu0 0.0
        %1258 = vmatpush1.msra.mxu0 0.0
        %1259 = vmatprep.subr.mxu0 0.0
        %1260 = vmatpush1.msra.mxu0 0.0
        %1261 = vmatprep.subr.mxu0 0.0
        %1262 = vmatpush1.msra.mxu0 0.0
        %1263 = vmatprep.subr.mxu0 0.0
        %1264 = vmatpush1.msra.mxu0 0.0
        %1265 = vmatprep.subr.mxu0 0.0
        %1266 = vmatpush1.msra.mxu0 0.0
        %1267 = vmatprep.subr.mxu0 0.0
        %1268 = vmatpush1.msra.mxu0 0.0
        %1269 = vmatprep.subr.mxu0 0.0
        %1270 = vmatpush1.msra.mxu0 0.0
        %1271 = vmatprep.subr.mxu0 0.0
        %1272 = vmatpush1.msra.mxu0 0.0
        %1273 = vmatprep.subr.mxu0 0.0
        %1274 = vmatpush1.msra.mxu0 0.0
        %1275 = vmatprep.subr.mxu0 0.0
        %1276 = vmatpush1.msra.mxu0 0.0
        %1277 = vmatprep.subr.mxu0 0.0
        %1278 = vmatpush1.msra.mxu0 0.0
        %1279 = vmatprep.subr.mxu0 0.0
        %1280 = vmatpush1.msra.mxu0 0.0
        %1281 = vmatprep.subr.mxu0 0.0
        %1282 = vmatpush1.msra.mxu0 0.0
        %1283 = vmatprep.subr.mxu0 0.0
        %1284 = vmatpush1.msra.mxu0 0.0
        %1285 = vmatprep.subr.mxu0 0.0
        %1286 = vmatpush1.msra.mxu0 0.0
        %1287 = vmatprep.subr.mxu0 0.0
        %1288 = vmatpush1.msra.mxu0 0.0
        %1289 = vmatprep.subr.mxu0 0.0
        %1290 = vmatpush1.msra.mxu0 0.0
        %1291 = vmatprep.subr.mxu0 0.0
        %1292 = vmatpush1.msra.mxu0 0.0
        %1293 = vmatprep.mubr.f32.mxu0 0.0
        %v1294 = vand.u32 %v810, 4294901760
        %1295 = vmatmul.mubr.f32.gmra.mrb[0].mxu0 %v1294
        %v1296 = vpop.f32.mrb[0].mxu0
        %v1297 = vadd.f32 %v1196, %v1296
        %v1298 = vpop.f32.mrb[0].mxu0
        %1299 = vmatprep.mubr.f32.mxu0 0.0
        %v1300 = vand.u32 %v813, 4294901760
        %1301 = vmatmul.mubr.f32.gmra.mrb[0].mxu0 %v1300
        %v1302 = vpop.f32.mrb[0].mxu0
        %v1303 = vadd.f32 %v1204, %v1302
        %v1304 = vpop.f32.mrb[0].mxu0
        %1305 = vmatprep.mubr.f32.mxu0 0.0
        %v1306 = vand.u32 %v816, 4294901760
        %1307 = vmatmul.mubr.f32.gmra.mrb[0].mxu0 %v1306
        %v1308 = vpop.f32.mrb[0].mxu0
        %v1309 = vadd.f32 %v1212, %v1308
        %v1310 = vpop.f32.mrb[0].mxu0
        %1311 = vmatprep.mubr.f32.mxu0 0.0
        %v1312 = vand.u32 %v819, 4294901760
        %1313 = vmatmul.mubr.f32.gmra.mrb[0].mxu0 %v1312
        %v1314 = vpop.f32.mrb[0].mxu0
        %v1315 = vadd.f32 %v1220, %v1314
        %v1316 = vpop.f32.mrb[0].mxu0
        %1317 = vdwg.mxu0
        %1318 = vmatprep.subr.mxu0 0.0
        %v1319 = vand.u32 %v807, 4294901760
        %1320 = vmatpush1.msra.mxu0 %v1319
        %1321 = vmatprep.subr.mxu0 0.0
        %v1322 = vand.u32 %v808, 4294901760
        %1323 = vmatpush1.msra.mxu0 %v1322
        %1324 = vmatprep.subr.mxu0 0.0
        %1325 = vmatpush1.msra.mxu0 0.0
        %1326 = vmatprep.subr.mxu0 0.0
        %1327 = vmatpush1.msra.mxu0 0.0
        %1328 = vmatprep.subr.mxu0 0.0
        %1329 = vmatpush1.msra.mxu0 0.0
        %1330 = vmatprep.subr.mxu0 0.0
        %1331 = vmatpush1.msra.mxu0 0.0
        %1332 = vmatprep.subr.mxu0 0.0
        %1333 = vmatpush1.msra.mxu0 0.0
        %1334 = vmatprep.subr.mxu0 0.0
        %1335 = vmatpush1.msra.mxu0 0.0
        %1336 = vmatprep.subr.mxu0 0.0
        %1337 = vmatpush1.msra.mxu0 0.0
        %1338 = vmatprep.subr.mxu0 0.0
        %1339 = vmatpush1.msra.mxu0 0.0
        %1340 = vmatprep.subr.mxu0 0.0
        %1341 = vmatpush1.msra.mxu0 0.0
        %1342 = vmatprep.subr.mxu0 0.0
        %1343 = vmatpush1.msra.mxu0 0.0
        %1344 = vmatprep.subr.mxu0 0.0
        %1345 = vmatpush1.msra.mxu0 0.0
        %1346 = vmatprep.subr.mxu0 0.0
        %1347 = vmatpush1.msra.mxu0 0.0
        %1348 = vmatprep.subr.mxu0 0.0
        %1349 = vmatpush1.msra.mxu0 0.0
        %1350 = vmatprep.subr.mxu0 0.0
        %1351 = vmatpush1.msra.mxu0 0.0
        %1352 = vmatprep.subr.mxu0 0.0
        %1353 = vmatpush1.msra.mxu0 0.0
        %1354 = vmatprep.subr.mxu0 0.0
        %1355 = vmatpush1.msra.mxu0 0.0
        %1356 = vmatprep.subr.mxu0 0.0
        %1357 = vmatpush1.msra.mxu0 0.0
        %1358 = vmatprep.subr.mxu0 0.0
        %1359 = vmatpush1.msra.mxu0 0.0
        %1360 = vmatprep.subr.mxu0 0.0
        %1361 = vmatpush1.msra.mxu0 0.0
        %1362 = vmatprep.subr.mxu0 0.0
        %1363 = vmatpush1.msra.mxu0 0.0
        %1364 = vmatprep.subr.mxu0 0.0
        %1365 = vmatpush1.msra.mxu0 0.0
        %1366 = vmatprep.subr.mxu0 0.0
        %1367 = vmatpush1.msra.mxu0 0.0
        %1368 = vmatprep.subr.mxu0 0.0
        %1369 = vmatpush1.msra.mxu0 0.0
        %1370 = vmatprep.subr.mxu0 0.0
        %1371 = vmatpush1.msra.mxu0 0.0
        %1372 = vmatprep.subr.mxu0 0.0
        %1373 = vmatpush1.msra.mxu0 0.0
        %1374 = vmatprep.subr.mxu0 0.0
        %1375 = vmatpush1.msra.mxu0 0.0
        %1376 = vmatprep.subr.mxu0 0.0
        %1377 = vmatpush1.msra.mxu0 0.0
        %1378 = vmatprep.subr.mxu0 0.0
        %1379 = vmatpush1.msra.mxu0 0.0
        %1380 = vmatprep.subr.mxu0 0.0
        %1381 = vmatpush1.msra.mxu0 0.0
        %1382 = vmatprep.subr.mxu0 0.0
        %1383 = vmatpush1.msra.mxu0 0.0
        %1384 = vmatprep.mubr.f32.mxu0 0.0
        %v1385 = vand.u32 %v810, 4294901760
        %1386 = vmatmul.mubr.f32.gmra.mrb[0].mxu0 %v1385
        %v1387 = vpop.f32.mrb[0].mxu0
        %v1388 = vadd.f32 %v1297, %v1387
        %v1389 = vpop.f32.mrb[0].mxu0
        %1390 = vmatprep.mubr.f32.mxu0 0.0
        %v1391 = vand.u32 %v813, 4294901760
        %1392 = vmatmul.mubr.f32.gmra.mrb[0].mxu0 %v1391
        %v1393 = vpop.f32.mrb[0].mxu0
        %v1394 = vadd.f32 %v1303, %v1393
        %v1395 = vpop.f32.mrb[0].mxu0
        %1396 = vmatprep.mubr.f32.mxu0 0.0
        %v1397 = vand.u32 %v816, 4294901760
        %1398 = vmatmul.mubr.f32.gmra.mrb[0].mxu0 %v1397
        %v1399 = vpop.f32.mrb[0].mxu0
        %v1400 = vadd.f32 %v1309, %v1399
        %v1401 = vpop.f32.mrb[0].mxu0
        %1402 = vmatprep.mubr.f32.mxu0 0.0
        %v1403 = vand.u32 %v819, 4294901760
        %1404 = vmatmul.mubr.f32.gmra.mrb[0].mxu0 %v1403
        %v1405 = vpop.f32.mrb[0].mxu0
        %v1406 = vadd.f32 %v1315, %v1405
        %v1407 = vpop.f32.mrb[0].mxu0
        %1408 = vdwg.mxu0
        %1409 = vst.msk [vmem:[%s188] sm:$0xff] %vm798, %v1388
        %1410 = vst.msk [vmem:[%s188 + $0x8] sm:$0xff] %vm798, %v1394
        %1411 = vst.msk [vmem:[%s188 + $0x10] sm:$0xff] %vm798, %v1400
        %1412 = vst.msk [vmem:[%s188 + $0x18] sm:$0xff] %vm798, %v1406
        %s1413 = scalar_lea.vmem [#allocation2], 16
        %v1414 = vld [vmem:[%s1413] sm:$0xff]
        %v1415 = vld [vmem:[%s1413 + $0x8] sm:$0xff]
        %1416 = vmatprep.subr.mxu0 0.0
        %v1417 = vand.u32 %v1414, 4294901760
        %1418 = vmatpush1.msra.mxu0 %v1417
        %1419 = vmatprep.subr.mxu0 0.0
        %v1420 = vand.u32 %v1415, 4294901760
        %1421 = vmatpush1.msra.mxu0 %v1420
        %1422 = vmatprep.subr.mxu0 0.0
        %1423 = vmatpush1.msra.mxu0 0.0
        %1424 = vmatprep.subr.mxu0 0.0
        %1425 = vmatpush1.msra.mxu0 0.0
        %1426 = vmatprep.subr.mxu0 0.0
        %1427 = vmatpush1.msra.mxu0 0.0
        %1428 = vmatprep.subr.mxu0 0.0
        %1429 = vmatpush1.msra.mxu0 0.0
        %1430 = vmatprep.subr.mxu0 0.0
        %1431 = vmatpush1.msra.mxu0 0.0
        %1432 = vmatprep.subr.mxu0 0.0
        %1433 = vmatpush1.msra.mxu0 0.0
        %1434 = vmatprep.subr.mxu0 0.0
        %1435 = vmatpush1.msra.mxu0 0.0
        %1436 = vmatprep.subr.mxu0 0.0
        %1437 = vmatpush1.msra.mxu0 0.0
        %1438 = vmatprep.subr.mxu0 0.0
        %1439 = vmatpush1.msra.mxu0 0.0
        %1440 = vmatprep.subr.mxu0 0.0
        %1441 = vmatpush1.msra.mxu0 0.0
        %1442 = vmatprep.subr.mxu0 0.0
        %1443 = vmatpush1.msra.mxu0 0.0
        %1444 = vmatprep.subr.mxu0 0.0
        %1445 = vmatpush1.msra.mxu0 0.0
        %1446 = vmatprep.subr.mxu0 0.0
        %1447 = vmatpush1.msra.mxu0 0.0
        %1448 = vmatprep.subr.mxu0 0.0
        %1449 = vmatpush1.msra.mxu0 0.0
        %1450 = vmatprep.subr.mxu0 0.0
        %1451 = vmatpush1.msra.mxu0 0.0
        %1452 = vmatprep.subr.mxu0 0.0
        %1453 = vmatpush1.msra.mxu0 0.0
        %1454 = vmatprep.subr.mxu0 0.0
        %1455 = vmatpush1.msra.mxu0 0.0
        %1456 = vmatprep.subr.mxu0 0.0
        %1457 = vmatpush1.msra.mxu0 0.0
        %1458 = vmatprep.subr.mxu0 0.0
        %1459 = vmatpush1.msra.mxu0 0.0
        %1460 = vmatprep.subr.mxu0 0.0
        %1461 = vmatpush1.msra.mxu0 0.0
        %1462 = vmatprep.subr.mxu0 0.0
        %1463 = vmatpush1.msra.mxu0 0.0
        %1464 = vmatprep.subr.mxu0 0.0
        %1465 = vmatpush1.msra.mxu0 0.0
        %1466 = vmatprep.subr.mxu0 0.0
        %1467 = vmatpush1.msra.mxu0 0.0
        %1468 = vmatprep.subr.mxu0 0.0
        %1469 = vmatpush1.msra.mxu0 0.0
        %1470 = vmatprep.subr.mxu0 0.0
        %1471 = vmatpush1.msra.mxu0 0.0
        %1472 = vmatprep.subr.mxu0 0.0
        %1473 = vmatpush1.msra.mxu0 0.0
        %1474 = vmatprep.subr.mxu0 0.0
        %1475 = vmatpush1.msra.mxu0 0.0
        %1476 = vmatprep.subr.mxu0 0.0
        %1477 = vmatpush1.msra.mxu0 0.0
        %1478 = vmatprep.subr.mxu0 0.0
        %1479 = vmatpush1.msra.mxu0 0.0
        %1480 = vmatprep.subr.mxu0 0.0
        %1481 = vmatpush1.msra.mxu0 0.0
        %1482 = vmatprep.mubr.f32.mxu0 0.0
        %v1483 = vand.u32 %v810, 4294901760
        %v1484 = vsub.f32 %v810, %v1483
        %v1485 = vand.u32 %v1484, 4294901760
        %v1486 = vsub.f32 %v1484, %v1485
        %v1487 = vand.u32 %v1486, 4294901760
        %1488 = vmatmul.mubr.f32.gmra.mrb[0].mxu0 %v1487
        %v1489 = vpop.f32.mrb[0].mxu0
        %v1490 = vadd.f32 0.0, %v1489
        %v1491 = vpop.f32.mrb[0].mxu0
        %1492 = vmatprep.mubr.f32.mxu0 0.0
        %v1493 = vand.u32 %v813, 4294901760
        %v1494 = vsub.f32 %v813, %v1493
        %v1495 = vand.u32 %v1494, 4294901760
        %v1496 = vsub.f32 %v1494, %v1495
        %v1497 = vand.u32 %v1496, 4294901760
        %1498 = vmatmul.mubr.f32.gmra.mrb[0].mxu0 %v1497
        %v1499 = vpop.f32.mrb[0].mxu0
        %v1500 = vadd.f32 0.0, %v1499
        %v1501 = vpop.f32.mrb[0].mxu0
        %1502 = vmatprep.mubr.f32.mxu0 0.0
        %v1503 = vand.u32 %v816, 4294901760
        %v1504 = vsub.f32 %v816, %v1503
        %v1505 = vand.u32 %v1504, 4294901760
        %v1506 = vsub.f32 %v1504, %v1505
        %v1507 = vand.u32 %v1506, 4294901760
        %1508 = vmatmul.mubr.f32.gmra.mrb[0].mxu0 %v1507
        %v1509 = vpop.f32.mrb[0].mxu0
        %v1510 = vadd.f32 0.0, %v1509
        %v1511 = vpop.f32.mrb[0].mxu0
        %1512 = vmatprep.mubr.f32.mxu0 0.0
        %v1513 = vand.u32 %v819, 4294901760
        %v1514 = vsub.f32 %v819, %v1513
        %v1515 = vand.u32 %v1514, 4294901760
        %v1516 = vsub.f32 %v1514, %v1515
        %v1517 = vand.u32 %v1516, 4294901760
        %1518 = vmatmul.mubr.f32.gmra.mrb[0].mxu0 %v1517
        %v1519 = vpop.f32.mrb[0].mxu0
        %v1520 = vadd.f32 0.0, %v1519
        %v1521 = vpop.f32.mrb[0].mxu0
        %1522 = vdwg.mxu0
        %1523 = vmatprep.subr.mxu0 0.0
        %v1524 = vand.u32 %v1414, 4294901760
        %v1525 = vsub.f32 %v1414, %v1524
        %v1526 = vand.u32 %v1525, 4294901760
        %v1527 = vsub.f32 %v1525, %v1526
        %v1528 = vand.u32 %v1527, 4294901760
        %1529 = vmatpush1.msra.mxu0 %v1528
        %1530 = vmatprep.subr.mxu0 0.0
        %v1531 = vand.u32 %v1415, 4294901760
        %v1532 = vsub.f32 %v1415, %v1531
        %v1533 = vand.u32 %v1532, 4294901760
        %v1534 = vsub.f32 %v1532, %v1533
        %v1535 = vand.u32 %v1534, 4294901760
        %1536 = vmatpush1.msra.mxu0 %v1535
        %1537 = vmatprep.subr.mxu0 0.0
        %1538 = vmatpush1.msra.mxu0 0.0
        %1539 = vmatprep.subr.mxu0 0.0
        %1540 = vmatpush1.msra.mxu0 0.0
        %1541 = vmatprep.subr.mxu0 0.0
        %1542 = vmatpush1.msra.mxu0 0.0
        %1543 = vmatprep.subr.mxu0 0.0
        %1544 = vmatpush1.msra.mxu0 0.0
        %1545 = vmatprep.subr.mxu0 0.0
        %1546 = vmatpush1.msra.mxu0 0.0
        %1547 = vmatprep.subr.mxu0 0.0
        %1548 = vmatpush1.msra.mxu0 0.0
        %1549 = vmatprep.subr.mxu0 0.0
        %1550 = vmatpush1.msra.mxu0 0.0
        %1551 = vmatprep.subr.mxu0 0.0
        %1552 = vmatpush1.msra.mxu0 0.0
        %1553 = vmatprep.subr.mxu0 0.0
        %1554 = vmatpush1.msra.mxu0 0.0
        %1555 = vmatprep.subr.mxu0 0.0
        %1556 = vmatpush1.msra.mxu0 0.0
        %1557 = vmatprep.subr.mxu0 0.0
        %1558 = vmatpush1.msra.mxu0 0.0
        %1559 = vmatprep.subr.mxu0 0.0
        %1560 = vmatpush1.msra.mxu0 0.0
        %1561 = vmatprep.subr.mxu0 0.0
        %1562 = vmatpush1.msra.mxu0 0.0
        %1563 = vmatprep.subr.mxu0 0.0
        %1564 = vmatpush1.msra.mxu0 0.0
        %1565 = vmatprep.subr.mxu0 0.0
        %1566 = vmatpush1.msra.mxu0 0.0
        %1567 = vmatprep.subr.mxu0 0.0
        %1568 = vmatpush1.msra.mxu0 0.0
        %1569 = vmatprep.subr.mxu0 0.0
        %1570 = vmatpush1.msra.mxu0 0.0
        %1571 = vmatprep.subr.mxu0 0.0
        %1572 = vmatpush1.msra.mxu0 0.0
        %1573 = vmatprep.subr.mxu0 0.0
        %1574 = vmatpush1.msra.mxu0 0.0
        %1575 = vmatprep.subr.mxu0 0.0
        %1576 = vmatpush1.msra.mxu0 0.0
        %1577 = vmatprep.subr.mxu0 0.0
        %1578 = vmatpush1.msra.mxu0 0.0
        %1579 = vmatprep.subr.mxu0 0.0
        %1580 = vmatpush1.msra.mxu0 0.0
        %1581 = vmatprep.subr.mxu0 0.0
        %1582 = vmatpush1.msra.mxu0 0.0
        %1583 = vmatprep.subr.mxu0 0.0
        %1584 = vmatpush1.msra.mxu0 0.0
        %1585 = vmatprep.subr.mxu0 0.0
        %1586 = vmatpush1.msra.mxu0 0.0
        %1587 = vmatprep.subr.mxu0 0.0
        %1588 = vmatpush1.msra.mxu0 0.0
        %1589 = vmatprep.subr.mxu0 0.0
        %1590 = vmatpush1.msra.mxu0 0.0
        %1591 = vmatprep.subr.mxu0 0.0
        %1592 = vmatpush1.msra.mxu0 0.0
        %1593 = vmatprep.subr.mxu0 0.0
        %1594 = vmatpush1.msra.mxu0 0.0
        %1595 = vmatprep.subr.mxu0 0.0
        %1596 = vmatpush1.msra.mxu0 0.0
        %1597 = vmatprep.mubr.f32.mxu0 0.0
        %v1598 = vand.u32 %v810, 4294901760
        %1599 = vmatmul.mubr.f32.gmra.mrb[0].mxu0 %v1598
        %v1600 = vpop.f32.mrb[0].mxu0
        %v1601 = vadd.f32 %v1490, %v1600
        %v1602 = vpop.f32.mrb[0].mxu0
        %1603 = vmatprep.mubr.f32.mxu0 0.0
        %v1604 = vand.u32 %v813, 4294901760
        %1605 = vmatmul.mubr.f32.gmra.mrb[0].mxu0 %v1604
        %v1606 = vpop.f32.mrb[0].mxu0
        %v1607 = vadd.f32 %v1500, %v1606
        %v1608 = vpop.f32.mrb[0].mxu0
        %1609 = vmatprep.mubr.f32.mxu0 0.0
        %v1610 = vand.u32 %v816, 4294901760
        %1611 = vmatmul.mubr.f32.gmra.mrb[0].mxu0 %v1610
        %v1612 = vpop.f32.mrb[0].mxu0
        %v1613 = vadd.f32 %v1510, %v1612
        %v1614 = vpop.f32.mrb[0].mxu0
        %1615 = vmatprep.mubr.f32.mxu0 0.0
        %v1616 = vand.u32 %v819, 4294901760
        %1617 = vmatmul.mubr.f32.gmra.mrb[0].mxu0 %v1616
        %v1618 = vpop.f32.mrb[0].mxu0
        %v1619 = vadd.f32 %v1520, %v1618
        %v1620 = vpop.f32.mrb[0].mxu0
        %1621 = vdwg.mxu0
        %1622 = vmatprep.subr.mxu0 0.0
        %v1623 = vand.u32 %v1414, 4294901760
        %v1624 = vsub.f32 %v1414, %v1623
        %1625 = vmatpush1.msra.mxu0 %v1624
        %1626 = vmatprep.subr.mxu0 0.0
        %v1627 = vand.u32 %v1415, 4294901760
        %v1628 = vsub.f32 %v1415, %v1627
        %1629 = vmatpush1.msra.mxu0 %v1628
        %1630 = vmatprep.subr.mxu0 0.0
        %1631 = vmatpush1.msra.mxu0 0.0
        %1632 = vmatprep.subr.mxu0 0.0
        %1633 = vmatpush1.msra.mxu0 0.0
        %1634 = vmatprep.subr.mxu0 0.0
        %1635 = vmatpush1.msra.mxu0 0.0
        %1636 = vmatprep.subr.mxu0 0.0
        %1637 = vmatpush1.msra.mxu0 0.0
        %1638 = vmatprep.subr.mxu0 0.0
        %1639 = vmatpush1.msra.mxu0 0.0
        %1640 = vmatprep.subr.mxu0 0.0
        %1641 = vmatpush1.msra.mxu0 0.0
        %1642 = vmatprep.subr.mxu0 0.0
        %1643 = vmatpush1.msra.mxu0 0.0
        %1644 = vmatprep.subr.mxu0 0.0
        %1645 = vmatpush1.msra.mxu0 0.0
        %1646 = vmatprep.subr.mxu0 0.0
        %1647 = vmatpush1.msra.mxu0 0.0
        %1648 = vmatprep.subr.mxu0 0.0
        %1649 = vmatpush1.msra.mxu0 0.0
        %1650 = vmatprep.subr.mxu0 0.0
        %1651 = vmatpush1.msra.mxu0 0.0
        %1652 = vmatprep.subr.mxu0 0.0
        %1653 = vmatpush1.msra.mxu0 0.0
        %1654 = vmatprep.subr.mxu0 0.0
        %1655 = vmatpush1.msra.mxu0 0.0
        %1656 = vmatprep.subr.mxu0 0.0
        %1657 = vmatpush1.msra.mxu0 0.0
        %1658 = vmatprep.subr.mxu0 0.0
        %1659 = vmatpush1.msra.mxu0 0.0
        %1660 = vmatprep.subr.mxu0 0.0
        %1661 = vmatpush1.msra.mxu0 0.0
        %1662 = vmatprep.subr.mxu0 0.0
        %1663 = vmatpush1.msra.mxu0 0.0
        %1664 = vmatprep.subr.mxu0 0.0
        %1665 = vmatpush1.msra.mxu0 0.0
        %1666 = vmatprep.subr.mxu0 0.0
        %1667 = vmatpush1.msra.mxu0 0.0
        %1668 = vmatprep.subr.mxu0 0.0
        %1669 = vmatpush1.msra.mxu0 0.0
        %1670 = vmatprep.subr.mxu0 0.0
        %1671 = vmatpush1.msra.mxu0 0.0
        %1672 = vmatprep.subr.mxu0 0.0
        %1673 = vmatpush1.msra.mxu0 0.0
        %1674 = vmatprep.subr.mxu0 0.0
        %1675 = vmatpush1.msra.mxu0 0.0
        %1676 = vmatprep.subr.mxu0 0.0
        %1677 = vmatpush1.msra.mxu0 0.0
        %1678 = vmatprep.subr.mxu0 0.0
        %1679 = vmatpush1.msra.mxu0 0.0
        %1680 = vmatprep.subr.mxu0 0.0
        %1681 = vmatpush1.msra.mxu0 0.0
        %1682 = vmatprep.subr.mxu0 0.0
        %1683 = vmatpush1.msra.mxu0 0.0
        %1684 = vmatprep.subr.mxu0 0.0
        %1685 = vmatpush1.msra.mxu0 0.0
        %1686 = vmatprep.subr.mxu0 0.0
        %1687 = vmatpush1.msra.mxu0 0.0
        %1688 = vmatprep.subr.mxu0 0.0
        %1689 = vmatpush1.msra.mxu0 0.0
        %1690 = vmatprep.mubr.f32.mxu0 0.0
        %v1691 = vand.u32 %v810, 4294901760
        %v1692 = vsub.f32 %v810, %v1691
        %1693 = vmatmul.mubr.f32.gmra.mrb[0].mxu0 %v1692
        %v1694 = vpop.f32.mrb[0].mxu0
        %v1695 = vadd.f32 %v1601, %v1694
        %v1696 = vpop.f32.mrb[0].mxu0
        %1697 = vmatprep.mubr.f32.mxu0 0.0
        %v1698 = vand.u32 %v813, 4294901760
        %v1699 = vsub.f32 %v813, %v1698
        %1700 = vmatmul.mubr.f32.gmra.mrb[0].mxu0 %v1699
        %v1701 = vpop.f32.mrb[0].mxu0
        %v1702 = vadd.f32 %v1607, %v1701
        %v1703 = vpop.f32.mrb[0].mxu0
        %1704 = vmatprep.mubr.f32.mxu0 0.0
        %v1705 = vand.u32 %v816, 4294901760
        %v1706 = vsub.f32 %v816, %v1705
        %1707 = vmatmul.mubr.f32.gmra.mrb[0].mxu0 %v1706
        %v1708 = vpop.f32.mrb[0].mxu0
        %v1709 = vadd.f32 %v1613, %v1708
        %v1710 = vpop.f32.mrb[0].mxu0
        %1711 = vmatprep.mubr.f32.mxu0 0.0
        %v1712 = vand.u32 %v819, 4294901760
        %v1713 = vsub.f32 %v819, %v1712
        %1714 = vmatmul.mubr.f32.gmra.mrb[0].mxu0 %v1713
        %v1715 = vpop.f32.mrb[0].mxu0
        %v1716 = vadd.f32 %v1619, %v1715
        %v1717 = vpop.f32.mrb[0].mxu0
        %1718 = vdwg.mxu0
        %1719 = vmatprep.subr.mxu0 0.0
        %v1720 = vand.u32 %v1414, 4294901760
        %1721 = vmatpush1.msra.mxu0 %v1720
        %1722 = vmatprep.subr.mxu0 0.0
        %v1723 = vand.u32 %v1415, 4294901760
        %1724 = vmatpush1.msra.mxu0 %v1723
        %1725 = vmatprep.subr.mxu0 0.0
        %1726 = vmatpush1.msra.mxu0 0.0
        %1727 = vmatprep.subr.mxu0 0.0
        %1728 = vmatpush1.msra.mxu0 0.0
        %1729 = vmatprep.subr.mxu0 0.0
        %1730 = vmatpush1.msra.mxu0 0.0
        %1731 = vmatprep.subr.mxu0 0.0
        %1732 = vmatpush1.msra.mxu0 0.0
        %1733 = vmatprep.subr.mxu0 0.0
        %1734 = vmatpush1.msra.mxu0 0.0
        %1735 = vmatprep.subr.mxu0 0.0
        %1736 = vmatpush1.msra.mxu0 0.0
        %1737 = vmatprep.subr.mxu0 0.0
        %1738 = vmatpush1.msra.mxu0 0.0
        %1739 = vmatprep.subr.mxu0 0.0
        %1740 = vmatpush1.msra.mxu0 0.0
        %1741 = vmatprep.subr.mxu0 0.0
        %1742 = vmatpush1.msra.mxu0 0.0
        %1743 = vmatprep.subr.mxu0 0.0
        %1744 = vmatpush1.msra.mxu0 0.0
        %1745 = vmatprep.subr.mxu0 0.0
        %1746 = vmatpush1.msra.mxu0 0.0
        %1747 = vmatprep.subr.mxu0 0.0
        %1748 = vmatpush1.msra.mxu0 0.0
        %1749 = vmatprep.subr.mxu0 0.0
        %1750 = vmatpush1.msra.mxu0 0.0
        %1751 = vmatprep.subr.mxu0 0.0
        %1752 = vmatpush1.msra.mxu0 0.0
        %1753 = vmatprep.subr.mxu0 0.0
        %1754 = vmatpush1.msra.mxu0 0.0
        %1755 = vmatprep.subr.mxu0 0.0
        %1756 = vmatpush1.msra.mxu0 0.0
        %1757 = vmatprep.subr.mxu0 0.0
        %1758 = vmatpush1.msra.mxu0 0.0
        %1759 = vmatprep.subr.mxu0 0.0
        %1760 = vmatpush1.msra.mxu0 0.0
        %1761 = vmatprep.subr.mxu0 0.0
        %1762 = vmatpush1.msra.mxu0 0.0
        %1763 = vmatprep.subr.mxu0 0.0
        %1764 = vmatpush1.msra.mxu0 0.0
        %1765 = vmatprep.subr.mxu0 0.0
        %1766 = vmatpush1.msra.mxu0 0.0
        %1767 = vmatprep.subr.mxu0 0.0
        %1768 = vmatpush1.msra.mxu0 0.0
        %1769 = vmatprep.subr.mxu0 0.0
        %1770 = vmatpush1.msra.mxu0 0.0
        %1771 = vmatprep.subr.mxu0 0.0
        %1772 = vmatpush1.msra.mxu0 0.0
        %1773 = vmatprep.subr.mxu0 0.0
        %1774 = vmatpush1.msra.mxu0 0.0
        %1775 = vmatprep.subr.mxu0 0.0
        %1776 = vmatpush1.msra.mxu0 0.0
        %1777 = vmatprep.subr.mxu0 0.0
        %1778 = vmatpush1.msra.mxu0 0.0
        %1779 = vmatprep.subr.mxu0 0.0
        %1780 = vmatpush1.msra.mxu0 0.0
        %1781 = vmatprep.subr.mxu0 0.0
        %1782 = vmatpush1.msra.mxu0 0.0
        %1783 = vmatprep.subr.mxu0 0.0
        %1784 = vmatpush1.msra.mxu0 0.0
        %1785 = vmatprep.mubr.f32.mxu0 0.0
        %v1786 = vand.u32 %v810, 4294901760
        %v1787 = vsub.f32 %v810, %v1786
        %v1788 = vand.u32 %v1787, 4294901760
        %1789 = vmatmul.mubr.f32.gmra.mrb[0].mxu0 %v1788
        %v1790 = vpop.f32.mrb[0].mxu0
        %v1791 = vadd.f32 %v1695, %v1790
        %v1792 = vpop.f32.mrb[0].mxu0
        %1793 = vmatprep.mubr.f32.mxu0 0.0
        %v1794 = vand.u32 %v813, 4294901760
        %v1795 = vsub.f32 %v813, %v1794
        %v1796 = vand.u32 %v1795, 4294901760
        %1797 = vmatmul.mubr.f32.gmra.mrb[0].mxu0 %v1796
        %v1798 = vpop.f32.mrb[0].mxu0
        %v1799 = vadd.f32 %v1702, %v1798
        %v1800 = vpop.f32.mrb[0].mxu0
        %1801 = vmatprep.mubr.f32.mxu0 0.0
        %v1802 = vand.u32 %v816, 4294901760
        %v1803 = vsub.f32 %v816, %v1802
        %v1804 = vand.u32 %v1803, 4294901760
        %1805 = vmatmul.mubr.f32.gmra.mrb[0].mxu0 %v1804
        %v1806 = vpop.f32.mrb[0].mxu0
        %v1807 = vadd.f32 %v1709, %v1806
        %v1808 = vpop.f32.mrb[0].mxu0
        %1809 = vmatprep.mubr.f32.mxu0 0.0
        %v1810 = vand.u32 %v819, 4294901760
        %v1811 = vsub.f32 %v819, %v1810
        %v1812 = vand.u32 %v1811, 4294901760
        %1813 = vmatmul.mubr.f32.gmra.mrb[0].mxu0 %v1812
        %v1814 = vpop.f32.mrb[0].mxu0
        %v1815 = vadd.f32 %v1716, %v1814
        %v1816 = vpop.f32.mrb[0].mxu0
        %1817 = vdwg.mxu0
        %1818 = vmatprep.subr.mxu0 0.0
        %v1819 = vand.u32 %v1414, 4294901760
        %v1820 = vsub.f32 %v1414, %v1819
        %v1821 = vand.u32 %v1820, 4294901760
        %1822 = vmatpush1.msra.mxu0 %v1821
        %1823 = vmatprep.subr.mxu0 0.0
        %v1824 = vand.u32 %v1415, 4294901760
        %v1825 = vsub.f32 %v1415, %v1824
        %v1826 = vand.u32 %v1825, 4294901760
        %1827 = vmatpush1.msra.mxu0 %v1826
        %1828 = vmatprep.subr.mxu0 0.0
        %1829 = vmatpush1.msra.mxu0 0.0
        %1830 = vmatprep.subr.mxu0 0.0
        %1831 = vmatpush1.msra.mxu0 0.0
        %1832 = vmatprep.subr.mxu0 0.0
        %1833 = vmatpush1.msra.mxu0 0.0
        %1834 = vmatprep.subr.mxu0 0.0
        %1835 = vmatpush1.msra.mxu0 0.0
        %1836 = vmatprep.subr.mxu0 0.0
        %1837 = vmatpush1.msra.mxu0 0.0
        %1838 = vmatprep.subr.mxu0 0.0
        %1839 = vmatpush1.msra.mxu0 0.0
        %1840 = vmatprep.subr.mxu0 0.0
        %1841 = vmatpush1.msra.mxu0 0.0
        %1842 = vmatprep.subr.mxu0 0.0
        %1843 = vmatpush1.msra.mxu0 0.0
        %1844 = vmatprep.subr.mxu0 0.0
        %1845 = vmatpush1.msra.mxu0 0.0
        %1846 = vmatprep.subr.mxu0 0.0
        %1847 = vmatpush1.msra.mxu0 0.0
        %1848 = vmatprep.subr.mxu0 0.0
        %1849 = vmatpush1.msra.mxu0 0.0
        %1850 = vmatprep.subr.mxu0 0.0
        %1851 = vmatpush1.msra.mxu0 0.0
        %1852 = vmatprep.subr.mxu0 0.0
        %1853 = vmatpush1.msra.mxu0 0.0
        %1854 = vmatprep.subr.mxu0 0.0
        %1855 = vmatpush1.msra.mxu0 0.0
        %1856 = vmatprep.subr.mxu0 0.0
        %1857 = vmatpush1.msra.mxu0 0.0
        %1858 = vmatprep.subr.mxu0 0.0
        %1859 = vmatpush1.msra.mxu0 0.0
        %1860 = vmatprep.subr.mxu0 0.0
        %1861 = vmatpush1.msra.mxu0 0.0
        %1862 = vmatprep.subr.mxu0 0.0
        %1863 = vmatpush1.msra.mxu0 0.0
        %1864 = vmatprep.subr.mxu0 0.0
        %1865 = vmatpush1.msra.mxu0 0.0
        %1866 = vmatprep.subr.mxu0 0.0
        %1867 = vmatpush1.msra.mxu0 0.0
        %1868 = vmatprep.subr.mxu0 0.0
        %1869 = vmatpush1.msra.mxu0 0.0
        %1870 = vmatprep.subr.mxu0 0.0
        %1871 = vmatpush1.msra.mxu0 0.0
        %1872 = vmatprep.subr.mxu0 0.0
        %1873 = vmatpush1.msra.mxu0 0.0
        %1874 = vmatprep.subr.mxu0 0.0
        %1875 = vmatpush1.msra.mxu0 0.0
        %1876 = vmatprep.subr.mxu0 0.0
        %1877 = vmatpush1.msra.mxu0 0.0
        %1878 = vmatprep.subr.mxu0 0.0
        %1879 = vmatpush1.msra.mxu0 0.0
        %1880 = vmatprep.subr.mxu0 0.0
        %1881 = vmatpush1.msra.mxu0 0.0
        %1882 = vmatprep.subr.mxu0 0.0
        %1883 = vmatpush1.msra.mxu0 0.0
        %1884 = vmatprep.subr.mxu0 0.0
        %1885 = vmatpush1.msra.mxu0 0.0
        %1886 = vmatprep.subr.mxu0 0.0
        %1887 = vmatpush1.msra.mxu0 0.0
        %1888 = vmatprep.mubr.f32.mxu0 0.0
        %v1889 = vand.u32 %v810, 4294901760
        %1890 = vmatmul.mubr.f32.gmra.mrb[0].mxu0 %v1889
        %v1891 = vpop.f32.mrb[0].mxu0
        %v1892 = vadd.f32 %v1791, %v1891
        %v1893 = vpop.f32.mrb[0].mxu0
        %1894 = vmatprep.mubr.f32.mxu0 0.0
        %v1895 = vand.u32 %v813, 4294901760
        %1896 = vmatmul.mubr.f32.gmra.mrb[0].mxu0 %v1895
        %v1897 = vpop.f32.mrb[0].mxu0
        %v1898 = vadd.f32 %v1799, %v1897
        %v1899 = vpop.f32.mrb[0].mxu0
        %1900 = vmatprep.mubr.f32.mxu0 0.0
        %v1901 = vand.u32 %v816, 4294901760
        %1902 = vmatmul.mubr.f32.gmra.mrb[0].mxu0 %v1901
        %v1903 = vpop.f32.mrb[0].mxu0
        %v1904 = vadd.f32 %v1807, %v1903
        %v1905 = vpop.f32.mrb[0].mxu0
        %1906 = vmatprep.mubr.f32.mxu0 0.0
        %v1907 = vand.u32 %v819, 4294901760
        %1908 = vmatmul.mubr.f32.gmra.mrb[0].mxu0 %v1907
        %v1909 = vpop.f32.mrb[0].mxu0
        %v1910 = vadd.f32 %v1815, %v1909
        %v1911 = vpop.f32.mrb[0].mxu0
        %1912 = vdwg.mxu0
        %1913 = vmatprep.subr.mxu0 0.0
        %v1914 = vand.u32 %v1414, 4294901760
        %1915 = vmatpush1.msra.mxu0 %v1914
        %1916 = vmatprep.subr.mxu0 0.0
        %v1917 = vand.u32 %v1415, 4294901760
        %1918 = vmatpush1.msra.mxu0 %v1917
        %1919 = vmatprep.subr.mxu0 0.0
        %1920 = vmatpush1.msra.mxu0 0.0
        %1921 = vmatprep.subr.mxu0 0.0
        %1922 = vmatpush1.msra.mxu0 0.0
        %1923 = vmatprep.subr.mxu0 0.0
        %1924 = vmatpush1.msra.mxu0 0.0
        %1925 = vmatprep.subr.mxu0 0.0
        %1926 = vmatpush1.msra.mxu0 0.0
        %1927 = vmatprep.subr.mxu0 0.0
        %1928 = vmatpush1.msra.mxu0 0.0
        %1929 = vmatprep.subr.mxu0 0.0
        %1930 = vmatpush1.msra.mxu0 0.0
        %1931 = vmatprep.subr.mxu0 0.0
        %1932 = vmatpush1.msra.mxu0 0.0
        %1933 = vmatprep.subr.mxu0 0.0
        %1934 = vmatpush1.msra.mxu0 0.0
        %1935 = vmatprep.subr.mxu0 0.0
        %1936 = vmatpush1.msra.mxu0 0.0
        %1937 = vmatprep.subr.mxu0 0.0
        %1938 = vmatpush1.msra.mxu0 0.0
        %1939 = vmatprep.subr.mxu0 0.0
        %1940 = vmatpush1.msra.mxu0 0.0
        %1941 = vmatprep.subr.mxu0 0.0
        %1942 = vmatpush1.msra.mxu0 0.0
        %1943 = vmatprep.subr.mxu0 0.0
        %1944 = vmatpush1.msra.mxu0 0.0
        %1945 = vmatprep.subr.mxu0 0.0
        %1946 = vmatpush1.msra.mxu0 0.0
        %1947 = vmatprep.subr.mxu0 0.0
        %1948 = vmatpush1.msra.mxu0 0.0
        %1949 = vmatprep.subr.mxu0 0.0
        %1950 = vmatpush1.msra.mxu0 0.0
        %1951 = vmatprep.subr.mxu0 0.0
        %1952 = vmatpush1.msra.mxu0 0.0
        %1953 = vmatprep.subr.mxu0 0.0
        %1954 = vmatpush1.msra.mxu0 0.0
        %1955 = vmatprep.subr.mxu0 0.0
        %1956 = vmatpush1.msra.mxu0 0.0
        %1957 = vmatprep.subr.mxu0 0.0
        %1958 = vmatpush1.msra.mxu0 0.0
        %1959 = vmatprep.subr.mxu0 0.0
        %1960 = vmatpush1.msra.mxu0 0.0
        %1961 = vmatprep.subr.mxu0 0.0
        %1962 = vmatpush1.msra.mxu0 0.0
        %1963 = vmatprep.subr.mxu0 0.0
        %1964 = vmatpush1.msra.mxu0 0.0
        %1965 = vmatprep.subr.mxu0 0.0
        %1966 = vmatpush1.msra.mxu0 0.0
        %1967 = vmatprep.subr.mxu0 0.0
        %1968 = vmatpush1.msra.mxu0 0.0
        %1969 = vmatprep.subr.mxu0 0.0
        %1970 = vmatpush1.msra.mxu0 0.0
        %1971 = vmatprep.subr.mxu0 0.0
        %1972 = vmatpush1.msra.mxu0 0.0
        %1973 = vmatprep.subr.mxu0 0.0
        %1974 = vmatpush1.msra.mxu0 0.0
        %1975 = vmatprep.subr.mxu0 0.0
        %1976 = vmatpush1.msra.mxu0 0.0
        %1977 = vmatprep.subr.mxu0 0.0
        %1978 = vmatpush1.msra.mxu0 0.0
        %1979 = vmatprep.mubr.f32.mxu0 0.0
        %v1980 = vand.u32 %v810, 4294901760
        %1981 = vmatmul.mubr.f32.gmra.mrb[0].mxu0 %v1980
        %v1982 = vpop.f32.mrb[0].mxu0
        %v1983 = vadd.f32 %v1892, %v1982
        %v1984 = vpop.f32.mrb[0].mxu0
        %1985 = vmatprep.mubr.f32.mxu0 0.0
        %v1986 = vand.u32 %v813, 4294901760
        %1987 = vmatmul.mubr.f32.gmra.mrb[0].mxu0 %v1986
        %v1988 = vpop.f32.mrb[0].mxu0
        %v1989 = vadd.f32 %v1898, %v1988
        %v1990 = vpop.f32.mrb[0].mxu0
        %1991 = vmatprep.mubr.f32.mxu0 0.0
        %v1992 = vand.u32 %v816, 4294901760
        %1993 = vmatmul.mubr.f32.gmra.mrb[0].mxu0 %v1992
        %v1994 = vpop.f32.mrb[0].mxu0
        %v1995 = vadd.f32 %v1904, %v1994
        %v1996 = vpop.f32.mrb[0].mxu0
        %1997 = vmatprep.mubr.f32.mxu0 0.0
        %v1998 = vand.u32 %v819, 4294901760
        %1999 = vmatmul.mubr.f32.gmra.mrb[0].mxu0 %v1998
        %v2000 = vpop.f32.mrb[0].mxu0
        %v2001 = vadd.f32 %v1910, %v2000
        %v2002 = vpop.f32.mrb[0].mxu0
        %2003 = vdwg.mxu0
        %s2004 = scalar_lea.vmem %s188, 32 [#allocation6]
        %2005 = vst.msk [vmem:[%s2004] sm:$0xff] %vm798, %v1983
        %2006 = vst.msk [vmem:[%s2004 + $0x8] sm:$0xff] %vm798, %v1989
        %2007 = vst.msk [vmem:[%s2004 + $0x10] sm:$0xff] %vm798, %v1995
        %2008 = vst.msk [vmem:[%s2004 + $0x18] sm:$0xff] %vm798, %v2001
        %s2009 = sand.u32 %s96, 1
        %s2010 = scalar_lea.sflag [#allocation5], %s2009
        %s2011 = sand.u32 %s96, 1
        %s2012 = smul.addr %s2011, 64
        %s2013 = scalar_lea.vmem [#allocation6], %s2012
        // Predicated region
        $region37: #{upsample.1} parent=31 // pred_check
          %p2014 = pneg %p106
        $region38: #{upsample.1} parent=31 // pred_check_branch
          %2016 = sbr.rel (%p2014) target = $region40
        $region39: #{upsample.1} parent=31 // pred_region
          %s2017 = smul.u32 8, %s20
          %s2019 = ssub.s32 1024, 1024
          %2020 = vsyncadd %s2010, %s2019
          %s2021 = smul.addr %s2017, 128
          %s2022 = scalar_lea.hbm %s3, %s2021
          %s2023 = sshll.u32 %s2013, 4
          %s2024 = int_to_ptr.vmem [resolvable:$true] %s2023
          %2029 = dma.vmem_to_hbm [thread:$0]  %s2024, 1024, %s2022, %s2010, 128, 128, 8
        $region40: #{upsample.1} parent=31 // pred_fallthru
          _
      $region32: #{upsample.1} parent=5 // pred_fallthru
        _
      %p2030 = scmp.le.s32.totalorder 2, %s15
      // Predicated region
      $region41: #{upsample.1} parent=5 // pred_check
        %p2031 = pneg %p2030
      $region42: #{upsample.1} parent=5 // pred_check_branch
        %2033 = sbr.rel (%p2031) target = $region44
      $region43: #{upsample.1} parent=5 // pred_region
        %s2034 = ssub.s32 %s15, 2
        // Predicated region
        $region45: #{upsample.1} parent=43 // pred_check
          %p2035 = pneg %p112
        $region46: #{upsample.1} parent=43 // pred_check_branch
          %2037 = sbr.rel (%p2035) target = $region48
        $region47: #{upsample.1} parent=43 // pred_region
          %s2038 = sand.u32 %s97, 1
          %s2039 = scalar_lea.sflag [#allocation5], %s2038
          %s2040 = sand.u32 %s97, 1
          %s2041 = smul.addr %s2040, 64
          %s2042 = scalar_lea.vmem [#allocation6], %s2041
          %2043 = dma.done %s2039, 1024
        $region48: #{upsample.1} parent=43 // pred_fallthru
          _
      $region44: #{upsample.1} parent=5 // pred_fallthru
        _
    $region6: #{upsample.1} parent=1 // loop_footer
      %s19 = sadd.s32 1, %s15
    $region7: #{upsample.1} parent=1 // loop_footer_branch
      %14 = sbr.rel target = $region3
    $region8: #{upsample.1} parent=1 // loop_exit
      _
    %2044 = vsyncpa [#allocation4], 1
    %s2045 = scalar_lea.sflag [#allocation4], 1
    %2046 = vsyncpa %s2045, 1
    %2047 = vsyncpa [#allocation5], 1
    %s2048 = scalar_lea.sflag [#allocation5], 1
    %2049 = vsyncpa %s2048, 1

</llo_original>
